<compile_context>
chip_gen: v7x
topology: tpu7x:2x2x1
jax: 0.10.0
libtpu: 0.0.40
codegen_flags: <defaults>
</compile_context>

<pallas_src>
import functools

import jax
import jax.numpy as jnp
from jax.experimental import pallas as pl
from jax.experimental.pallas import tpu as pltpu


# ---------------------------------------------------------------------------
# Fused kernel: one grid step == one batch sample, everything stays in VMEM.
# All activations are (channels, H*W) with H*W on the lane dimension.
# ---------------------------------------------------------------------------
def _coord_bottleneck_kernel(
    x_ref,                                   # (1, Cin, HW)
    w1_ref, b1_ref,                          # (planes, Cin), (planes, 1)
    w2_ref, b2_ref,                          # (planes, 9*planes), (planes, 1)
    w3_ref, b3_ref,                          # (c3, planes), (c3, 1)
    cw1_ref, cb1_ref,                        # (mip, c3), (mip, 1)
    cwh_ref, cbh_ref,                        # (c3, mip), (c3, 1)
    cww_ref, cbw_ref,                        # (c3, mip), (c3, 1)
    ph_ref, pw_ref,                          # (HW, H), (HW, W)   mean-pool matrices
    eh_ref, ew_ref,                          # (H, HW), (W, HW)   broadcast matrices
    ml_ref, mr_ref,                          # (1, HW)            column-boundary masks
    o_ref,                                   # (1, c3, HW)
    *, H, W, planes):
    f32 = jnp.float32
    HW = H * W

    x = x_ref[0].astype(f32)                                       # (Cin, HW)

    # ---- conv1 (1x1) + folded bn1 + relu ---------------------------------
    h1 = jnp.dot(w1_ref[...], x, preferred_element_type=f32) + b1_ref[...]
    h1 = jnp.maximum(h1, 0.0)                                      # (planes, HW)

    # ---- conv2 (3x3, stride=1, pad=1) + folded bn2 + relu ----------------
    # Column-shifted stack (kx = 0,1,2 == dx = -1,0,+1), zero outside the row.
    zc = jnp.zeros((planes, W), f32)
    hp = jnp.concatenate([zc, h1, zc], axis=1)                     # (planes, HW+2W)
    left = hp[:, W - 1:W - 1 + HW] * ml_ref[...]                   # x[.., w-1]
    right = hp[:, W + 1:W + 1 + HW] * mr_ref[...]                  # x[.., w+1]
    x3 = jnp.concatenate([left, h1, right], axis=0)                # (3*planes, HW)

    # Row shifts (ky = 0,1,2 == dy = -1,0,+1) via the same zero-pad trick,
    # stacked along the contraction so the whole 3x3 conv is ONE matmul with
    # K = 9*planes.
    zr = jnp.zeros((3 * planes, W), f32)
    x3p = jnp.concatenate([zr, x3, zr], axis=1)                    # (3*planes, HW+2W)
    x9 = jnp.concatenate(
        [x3p[:, 0:HW], x3p[:, W:W + HW], x3p[:, 2 * W:2 * W + HW]],
        axis=0)                                                    # (9*planes, HW)
    h2 = jnp.dot(w2_ref[...], x9, preferred_element_type=f32) + b2_ref[...]
    h2 = jnp.maximum(h2, 0.0)                                      # (planes, HW)

    # ---- conv3 (1x1) + folded bn3 (no relu) ------------------------------
    h3 = jnp.dot(w3_ref[...], h2, preferred_element_type=f32) + b3_ref[...]      # (c3, HW)

    # ---- Coordinate Attention --------------------------------------------
    # Directional mean pools as matmuls (keeps everything 2-D / lane-dense).
    xh = jnp.dot(h3, ph_ref[...], preferred_element_type=f32)      # (c3, H) mean over W
    xw = jnp.dot(h3, pw_ref[...], preferred_element_type=f32)      # (c3, W) mean over H

    # Shared squeeze conv applied to the concatenated [x_h | x_w] tensor
    # (exactly the torch.cat of the reference) + folded bn + h-swish.
    xhw = jnp.concatenate([xh, xw], axis=1)                        # (c3, H+W)
    y = jnp.dot(cw1_ref[...], xhw, preferred_element_type=f32) + cb1_ref[...]
    y = y * jnp.clip(y + 3.0, 0.0, 6.0) * (1.0 / 6.0)              # (mip, H+W)
    yh = y[:, :H]                                                  # (mip, H)
    yw = y[:, H:]                                                  # (mip, W)

    a_h = jax.nn.sigmoid(
        jnp.dot(cwh_ref[...], yh, preferred_element_type=f32) + cbh_ref[...])    # (c3, H)
    a_w = jax.nn.sigmoid(
        jnp.dot(cww_ref[...], yw, preferred_element_type=f32) + cbw_ref[...])    # (c3, W)

    # Broadcast a_h over W and a_w over H via indicator matmuls (no reshapes).
    ah_e = jnp.dot(a_h, eh_ref[...], preferred_element_type=f32)   # (c3, HW)
    aw_e = jnp.dot(a_w, ew_ref[...], preferred_element_type=f32)   # (c3, HW)

    # ---- gating + identity residual + relu -------------------------------
    out = h3 * ah_e * aw_e + x
    o_ref[0] = jnp.maximum(out, 0.0).astype(o_ref.dtype)


# ---------------------------------------------------------------------------
# Wrapper: NCHW in / NCHW out (PyTorch layout), grid over batch.
# ---------------------------------------------------------------------------
def _replicated_spec(a):
    zeros = (0,) * a.ndim
    return pl.BlockSpec(a.shape, lambda n, _z=zeros: _z)


def coord_bottleneck_forward(x_nchw, params):
    N, Cin, H, W = x_nchw.shape
    HW = H * W
    planes = params["w1"].shape[0]
    c3 = params["w3"].shape[0]
    # TODO(synk): downsample / stride>1 not supported -> identity skip only.
    assert Cin == c3, "identity skip requires inplanes == planes * expansion"

    x_flat = x_nchw.reshape(N, Cin, HW)

    # Shape-derived constant operands (pool / broadcast matrices, column masks).
    p_idx = jnp.arange(HW, dtype=jnp.int32)
    row = p_idx // W
    col = p_idx % W
    ph = (row[:, None] == jnp.arange(H)[None, :]).astype(jnp.float32) / W   # (HW, H)
    pw = (col[:, None] == jnp.arange(W)[None, :]).astype(jnp.float32) / H   # (HW, W)
    eh = (jnp.arange(H)[:, None] == row[None, :]).astype(jnp.float32)       # (H, HW)
    ew = (jnp.arange(W)[:, None] == col[None, :]).astype(jnp.float32)       # (W, HW)
    ml = (col != 0).astype(jnp.float32)[None, :]                            # (1, HW)
    mr = (col != W - 1).astype(jnp.float32)[None, :]                        # (1, HW)

    kernel = functools.partial(_coord_bottleneck_kernel, H=H, W=W, planes=planes)

    operands = (
        x_flat,
        params["w1"], params["b1"],
        params["w2"], params["b2"],
        params["w3"], params["b3"],
        params["ca_w1"], params["ca_b1"],
        params["ca_wh"], params["ca_bh"],
        params["ca_ww"], params["ca_bw"],
        ph, pw, eh, ew, ml, mr,
    )
    in_specs = [pl.BlockSpec((1, Cin, HW), lambda n: (n, 0, 0))]
    in_specs += [_replicated_spec(a) for a in operands[1:]]

    out_flat = pl.pallas_call(
        kernel,
        out_shape=jax.ShapeDtypeStruct((N, c3, HW), jnp.float32),
        grid=(N,),
        in_specs=in_specs,
        out_specs=pl.BlockSpec((1, c3, HW), lambda n: (n, 0, 0)),
        compiler_params=pltpu.CompilerParams(dimension_semantics=("parallel",)),
    )(*operands)
    return out_flat.reshape(N, c3, H, W)


# ---------------------------------------------------------------------------
# Deterministic synthetic parameters with inference-mode BN folded into the
# conv weights (scale) and a single per-channel bias.
# conv2 weight layout: (out, ky*3*planes + kx*planes + in)  -- matches the
# in-kernel 9-tap stacking order.
# ---------------------------------------------------------------------------
def make_params(key, inplanes, planes, expansion=4, reduction=32):
    c3 = planes * expansion
    mip = max(8, c3 // reduction)
    ks = jax.random.split(key, 13)

    def nrm(k, shape, s=0.2):
        return s * jax.random.normal(k, shape, jnp.float32)

    def bn(k, c):  # returns (scale, bias0) with bias0 = beta - mean * scale
        k1, k2, k3, k4 = jax.random.split(k, 4)
        gamma = 1.0 + 0.1 * jax.random.normal(k1, (c,), jnp.float32)
        beta = 0.1 * jax.random.normal(k2, (c,), jnp.float32)
        mean = 0.1 * jax.random.normal(k3, (c,), jnp.float32)
        var = 0.5 + jax.random.uniform(k4, (c,), jnp.float32)
        scale = gamma / jnp.sqrt(var + 1e-5)
        return scale, beta - mean * scale

    p = {}
    s1, f1 = bn(ks[1], planes)
    p["w1"] = nrm(ks[0], (planes, inplanes)) * s1[:, None]
    p["b1"] = f1[:, None]

    s2, f2 = bn(ks[3], planes)
    # generated as (out, ky, kx, in), BN-scaled per out channel, then flattened
    w2_4d = nrm(ks[2], (planes, 3, 3, planes)) * s2[:, None, None, None]
    p["w2"] = w2_4d.reshape(planes, 9 * planes)
    p["b2"] = f2[:, None]

    s3, f3 = bn(ks[5], c3)
    p["w3"] = nrm(ks[4], (c3, planes)) * s3[:, None]
    p["b3"] = f3[:, None]

    sc, fc = bn(ks[8], mip)
    ca_conv1_b = nrm(ks[7], (mip,), 0.05)
    p["ca_w1"] = nrm(ks[6], (mip, c3)) * sc[:, None]
    p["ca_b1"] = (fc + ca_conv1_b * sc)[:, None]
    p["ca_wh"] = nrm(ks[9], (c3, mip))
    p["ca_bh"] = nrm(ks[10], (c3,), 0.05)[:, None]
    p["ca_ww"] = nrm(ks[11], (c3, mip))
    p["ca_bw"] = nrm(ks[12], (c3,), 0.05)[:, None]
    return p


# ---------------------------------------------------------------------------
# Pure-JAX reference (same folded parameters) for a correctness check.
# ---------------------------------------------------------------------------
def reference_forward(x, p, planes):
    high = jax.lax.Precision.HIGHEST

    def conv1x1(t, w, b):
        return jnp.einsum("oc,nchw->nohw", w, t, precision=high) + \
            b[:, 0][None, :, None, None]

    h1 = jax.nn.relu(conv1x1(x, p["w1"], p["b1"]))
    w2 = p["w2"].reshape(planes, 3, 3, planes).transpose(0, 3, 1, 2)   # (O,I,ky,kx)
    h2 = jax.lax.conv_general_dilated(
        h1, w2, window_strides=(1, 1), padding=((1, 1), (1, 1)),
        dimension_numbers=("NCHW", "OIHW", "NCHW"), precision=high)
    h2 = jax.nn.relu(h2 + p["b2"][:, 0][None, :, None, None])
    h3 = conv1x1(h2, p["w3"], p["b3"])

    xh = h3.mean(axis=3)                        # (N, c3, H)
    xw = h3.mean(axis=2)                        # (N, c3, W)

    def pw1x1(t, w, b):
        return jnp.einsum("oc,ncl->nol", w, t, precision=high) + b[:, 0][None, :, None]

    def hsw(v):
        return v * jnp.clip(v + 3.0, 0.0, 6.0) / 6.0

    a_h = jax.nn.sigmoid(pw1x1(hsw(pw1x1(xh, p["ca_w1"], p["ca_b1"])),
                               p["ca_wh"], p["ca_bh"]))
    a_w = jax.nn.sigmoid(pw1x1(hsw(pw1x1(xw, p["ca_w1"], p["ca_b1"])),
                               p["ca_ww"], p["ca_bw"]))
    out = h3 * a_h[:, :, :, None] * a_w[:, :, None, :] + x
    return jax.nn.relu(out)


if __name__ == "__main__":
    inplanes, planes = 16, 4        # planes * expansion == inplanes -> identity skip
    N, H, W = 2, 16, 16

    key = jax.random.PRNGKey(0)
    k_x, k_p = jax.random.split(key)
    x = jax.random.normal(k_x, (N, inplanes, H, W), jnp.float32)    # NCHW, like PyTorch
    params = make_params(k_p, inplanes, planes)

    out = coord_bottleneck_forward(x, params)
    jax.block_until_ready(out)
    assert out.shape == (N, planes * 4, H, W)

    ref = reference_forward(x, params, planes)
    assert bool(jnp.allclose(out, ref, rtol=5e-3, atol=5e-3)), \
        "Pallas kernel does not match pure-JAX reference"
    print("KERNEL_OK")
</pallas_src>

<mosaic_0001>
module attributes {stable_mosaic.version = 11 : i64} {
  func.func @_coord_bottleneck_kernel(%arg0: i32, %arg1: memref<1x16x256xf32, #tpu.memory_space<vmem>>, %arg2: memref<4x16xf32, #tpu.memory_space<vmem>>, %arg3: memref<4x1xf32, #tpu.memory_space<vmem>>, %arg4: memref<4x36xf32, #tpu.memory_space<vmem>>, %arg5: memref<4x1xf32, #tpu.memory_space<vmem>>, %arg6: memref<16x4xf32, #tpu.memory_space<vmem>>, %arg7: memref<16x1xf32, #tpu.memory_space<vmem>>, %arg8: memref<8x16xf32, #tpu.memory_space<vmem>>, %arg9: memref<8x1xf32, #tpu.memory_space<vmem>>, %arg10: memref<16x8xf32, #tpu.memory_space<vmem>>, %arg11: memref<16x1xf32, #tpu.memory_space<vmem>>, %arg12: memref<16x8xf32, #tpu.memory_space<vmem>>, %arg13: memref<16x1xf32, #tpu.memory_space<vmem>>, %arg14: memref<256x16xf32, #tpu.memory_space<vmem>>, %arg15: memref<256x16xf32, #tpu.memory_space<vmem>>, %arg16: memref<16x256xf32, #tpu.memory_space<vmem>>, %arg17: memref<16x256xf32, #tpu.memory_space<vmem>>, %arg18: memref<1x256xf32, #tpu.memory_space<vmem>>, %arg19: memref<1x256xf32, #tpu.memory_space<vmem>>, %arg20: memref<1x16x256xf32, #tpu.memory_space<vmem>>) attributes {dimension_semantics = [#tpu.dimension_semantics<parallel>], iteration_bounds = array<i64: 2>, scalar_prefetch = 0 : i64, scratch_operands = 0 : i64, tpu.core_type = #tpu.core_type<tc>, window_params = [{transform_indices = @transform_0, window_bounds = array<i64: 1, 16, 256>}, {pipeline_mode = #tpu.pipeline_mode<synchronous>, transform_indices = @transform_1, window_bounds = array<i64: 4, 16>}, {pipeline_mode = #tpu.pipeline_mode<synchronous>, transform_indices = @transform_2, window_bounds = array<i64: 4, 1>}, {pipeline_mode = #tpu.pipeline_mode<synchronous>, transform_indices = @transform_3, window_bounds = array<i64: 4, 36>}, {pipeline_mode = #tpu.pipeline_mode<synchronous>, transform_indices = @transform_4, window_bounds = array<i64: 4, 1>}, {pipeline_mode = #tpu.pipeline_mode<synchronous>, transform_indices = @transform_5, window_bounds = array<i64: 16, 4>}, {pipeline_mode = #tpu.pipeline_mode<synchronous>, transform_indices = @transform_6, window_bounds = array<i64: 16, 1>}, {pipeline_mode = #tpu.pipeline_mode<synchronous>, transform_indices = @transform_7, window_bounds = array<i64: 8, 16>}, {pipeline_mode = #tpu.pipeline_mode<synchronous>, transform_indices = @transform_8, window_bounds = array<i64: 8, 1>}, {pipeline_mode = #tpu.pipeline_mode<synchronous>, transform_indices = @transform_9, window_bounds = array<i64: 16, 8>}, {pipeline_mode = #tpu.pipeline_mode<synchronous>, transform_indices = @transform_10, window_bounds = array<i64: 16, 1>}, {pipeline_mode = #tpu.pipeline_mode<synchronous>, transform_indices = @transform_11, window_bounds = array<i64: 16, 8>}, {pipeline_mode = #tpu.pipeline_mode<synchronous>, transform_indices = @transform_12, window_bounds = array<i64: 16, 1>}, {pipeline_mode = #tpu.pipeline_mode<synchronous>, transform_indices = @transform_13, window_bounds = array<i64: 256, 16>}, {pipeline_mode = #tpu.pipeline_mode<synchronous>, transform_indices = @transform_14, window_bounds = array<i64: 256, 16>}, {pipeline_mode = #tpu.pipeline_mode<synchronous>, transform_indices = @transform_15, window_bounds = array<i64: 16, 256>}, {pipeline_mode = #tpu.pipeline_mode<synchronous>, transform_indices = @transform_16, window_bounds = array<i64: 16, 256>}, {pipeline_mode = #tpu.pipeline_mode<synchronous>, transform_indices = @transform_17, window_bounds = array<i64: 1, 256>}, {pipeline_mode = #tpu.pipeline_mode<synchronous>, transform_indices = @transform_18, window_bounds = array<i64: 1, 256>}, {transform_indices = @transform_19, window_bounds = array<i64: 1, 16, 256>}]} {
    %c0 = arith.constant 0 : index
    %c0_0 = arith.constant 0 : index
    %c0_1 = arith.constant 0 : index
    %0 = vector.load %arg1[%c0, %c0_0, %c0_1] : memref<1x16x256xf32, #tpu.memory_space<vmem>>, vector<1x16x256xf32>
    %1 = vector.shape_cast %0 : vector<1x16x256xf32> to vector<16x256xf32>
    %c0_2 = arith.constant 0 : index
    %c0_3 = arith.constant 0 : index
    %2 = vector.load %arg2[%c0_2, %c0_3] : memref<4x16xf32, #tpu.memory_space<vmem>>, vector<4x16xf32>
    %cst = arith.constant dense<0.000000e+00> : vector<4x256xf32>
    %3 = tpu.matmul %2, %1, %cst {dimension_numbers = #tpu.dot_dimension_numbers<[1], [0], [0], [1], [0, 0, 1, 1], [], []>} : vector<4x16xf32>, vector<16x256xf32>, vector<4x256xf32> -> vector<4x256xf32>
    %c0_4 = arith.constant 0 : index
    %c0_5 = arith.constant 0 : index
    %4 = vector.load %arg3[%c0_4, %c0_5] : memref<4x1xf32, #tpu.memory_space<vmem>>, vector<4x1xf32>
    %5 = vector.broadcast %4 : vector<4x1xf32> to vector<4x256xf32>
    %6 = arith.addf %3, %5 : vector<4x256xf32>
    %cst_6 = arith.constant 0.000000e+00 : f32
    %7 = vector.broadcast %cst_6 : f32 to vector<4x256xf32>
    %8 = arith.maximumf %6, %7 : vector<4x256xf32>
    %cst_7 = arith.constant 0.000000e+00 : f32
    %9 = vector.broadcast %cst_7 : f32 to vector<4x16xf32>
    %10 = tpu.concatenate %9, %8, %9 in 1 : vector<4x16xf32>, vector<4x256xf32>, vector<4x16xf32> -> vector<4x288xf32>
    %11 = vector.extract_strided_slice %10 {offsets = [0, 15], sizes = [4, 256], strides = [1, 1]} : vector<4x288xf32> to vector<4x256xf32>
    %c0_8 = arith.constant 0 : index
    %c0_9 = arith.constant 0 : index
    %12 = vector.load %arg18[%c0_8, %c0_9] : memref<1x256xf32, #tpu.memory_space<vmem>>, vector<1x256xf32>
    %13 = vector.broadcast %12 : vector<1x256xf32> to vector<4x256xf32>
    %14 = arith.mulf %11, %13 : vector<4x256xf32>
    %15 = vector.extract_strided_slice %10 {offsets = [0, 17], sizes = [4, 256], strides = [1, 1]} : vector<4x288xf32> to vector<4x256xf32>
    %c0_10 = arith.constant 0 : index
    %c0_11 = arith.constant 0 : index
    %16 = vector.load %arg19[%c0_10, %c0_11] : memref<1x256xf32, #tpu.memory_space<vmem>>, vector<1x256xf32>
    %17 = vector.broadcast %16 : vector<1x256xf32> to vector<4x256xf32>
    %18 = arith.mulf %15, %17 : vector<4x256xf32>
    %19 = tpu.concatenate %14, %8, %18 in 0 : vector<4x256xf32>, vector<4x256xf32>, vector<4x256xf32> -> vector<12x256xf32>
    %cst_12 = arith.constant 0.000000e+00 : f32
    %20 = vector.broadcast %cst_12 : f32 to vector<12x16xf32>
    %21 = tpu.concatenate %20, %19, %20 in 1 : vector<12x16xf32>, vector<12x256xf32>, vector<12x16xf32> -> vector<12x288xf32>
    %22 = vector.extract_strided_slice %21 {offsets = [0, 0], sizes = [12, 256], strides = [1, 1]} : vector<12x288xf32> to vector<12x256xf32>
    %23 = vector.extract_strided_slice %21 {offsets = [0, 16], sizes = [12, 256], strides = [1, 1]} : vector<12x288xf32> to vector<12x256xf32>
    %24 = vector.extract_strided_slice %21 {offsets = [0, 32], sizes = [12, 256], strides = [1, 1]} : vector<12x288xf32> to vector<12x256xf32>
    %25 = tpu.concatenate %22, %23, %24 in 0 : vector<12x256xf32>, vector<12x256xf32>, vector<12x256xf32> -> vector<36x256xf32>
    %c0_13 = arith.constant 0 : index
    %c0_14 = arith.constant 0 : index
    %26 = vector.load %arg4[%c0_13, %c0_14] : memref<4x36xf32, #tpu.memory_space<vmem>>, vector<4x36xf32>
    %cst_15 = arith.constant dense<0.000000e+00> : vector<4x256xf32>
    %27 = tpu.matmul %26, %25, %cst_15 {dimension_numbers = #tpu.dot_dimension_numbers<[1], [0], [0], [1], [0, 0, 1, 1], [], []>} : vector<4x36xf32>, vector<36x256xf32>, vector<4x256xf32> -> vector<4x256xf32>
    %c0_16 = arith.constant 0 : index
    %c0_17 = arith.constant 0 : index
    %28 = vector.load %arg5[%c0_16, %c0_17] : memref<4x1xf32, #tpu.memory_space<vmem>>, vector<4x1xf32>
    %29 = vector.broadcast %28 : vector<4x1xf32> to vector<4x256xf32>
    %30 = arith.addf %27, %29 : vector<4x256xf32>
    %cst_18 = arith.constant 0.000000e+00 : f32
    %31 = vector.broadcast %cst_18 : f32 to vector<4x256xf32>
    %32 = arith.maximumf %30, %31 : vector<4x256xf32>
    %c0_19 = arith.constant 0 : index
    %c0_20 = arith.constant 0 : index
    %33 = vector.load %arg6[%c0_19, %c0_20] : memref<16x4xf32, #tpu.memory_space<vmem>>, vector<16x4xf32>
    %cst_21 = arith.constant dense<0.000000e+00> : vector<16x256xf32>
    %34 = tpu.matmul %33, %32, %cst_21 {dimension_numbers = #tpu.dot_dimension_numbers<[1], [0], [0], [1], [0, 0, 1, 1], [], []>} : vector<16x4xf32>, vector<4x256xf32>, vector<16x256xf32> -> vector<16x256xf32>
    %c0_22 = arith.constant 0 : index
    %c0_23 = arith.constant 0 : index
    %35 = vector.load %arg7[%c0_22, %c0_23] : memref<16x1xf32, #tpu.memory_space<vmem>>, vector<16x1xf32>
    %36 = vector.broadcast %35 : vector<16x1xf32> to vector<16x256xf32>
    %37 = arith.addf %34, %36 : vector<16x256xf32>
    %c0_24 = arith.constant 0 : index
    %c0_25 = arith.constant 0 : index
    %38 = vector.load %arg14[%c0_24, %c0_25] : memref<256x16xf32, #tpu.memory_space<vmem>>, vector<256x16xf32>
    %cst_26 = arith.constant dense<0.000000e+00> : vector<16x16xf32>
    %39 = tpu.matmul %37, %38, %cst_26 {dimension_numbers = #tpu.dot_dimension_numbers<[1], [0], [0], [1], [0, 0, 1, 1], [], []>} : vector<16x256xf32>, vector<256x16xf32>, vector<16x16xf32> -> vector<16x16xf32>
    %c0_27 = arith.constant 0 : index
    %c0_28 = arith.constant 0 : index
    %40 = vector.load %arg15[%c0_27, %c0_28] : memref<256x16xf32, #tpu.memory_space<vmem>>, vector<256x16xf32>
    %cst_29 = arith.constant dense<0.000000e+00> : vector<16x16xf32>
    %41 = tpu.matmul %37, %40, %cst_29 {dimension_numbers = #tpu.dot_dimension_numbers<[1], [0], [0], [1], [0, 0, 1, 1], [], []>} : vector<16x256xf32>, vector<256x16xf32>, vector<16x16xf32> -> vector<16x16xf32>
    %42 = tpu.concatenate %39, %41 in 1 : vector<16x16xf32>, vector<16x16xf32> -> vector<16x32xf32>
    %c0_30 = arith.constant 0 : index
    %c0_31 = arith.constant 0 : index
    %43 = vector.load %arg8[%c0_30, %c0_31] : memref<8x16xf32, #tpu.memory_space<vmem>>, vector<8x16xf32>
    %cst_32 = arith.constant dense<0.000000e+00> : vector<8x32xf32>
    %44 = tpu.matmul %43, %42, %cst_32 {dimension_numbers = #tpu.dot_dimension_numbers<[1], [0], [0], [1], [0, 0, 1, 1], [], []>} : vector<8x16xf32>, vector<16x32xf32>, vector<8x32xf32> -> vector<8x32xf32>
    %c0_33 = arith.constant 0 : index
    %c0_34 = arith.constant 0 : index
    %45 = vector.load %arg9[%c0_33, %c0_34] : memref<8x1xf32, #tpu.memory_space<vmem>>, vector<8x1xf32>
    %46 = vector.broadcast %45 : vector<8x1xf32> to vector<8x32xf32>
    %47 = arith.addf %44, %46 : vector<8x32xf32>
    %cst_35 = arith.constant 3.000000e+00 : f32
    %48 = vector.broadcast %cst_35 : f32 to vector<8x32xf32>
    %49 = arith.addf %47, %48 : vector<8x32xf32>
    %cst_36 = arith.constant 0.000000e+00 : f32
    %cst_37 = arith.constant 6.000000e+00 : f32
    %50 = vector.broadcast %cst_36 : f32 to vector<8x32xf32>
    %51 = arith.maximumf %50, %49 : vector<8x32xf32>
    %52 = vector.broadcast %cst_37 : f32 to vector<8x32xf32>
    %53 = arith.minimumf %52, %51 : vector<8x32xf32>
    %54 = arith.mulf %47, %53 : vector<8x32xf32>
    %cst_38 = arith.constant 0.166666672 : f32
    %55 = vector.broadcast %cst_38 : f32 to vector<8x32xf32>
    %56 = arith.mulf %54, %55 : vector<8x32xf32>
    %57 = vector.extract_strided_slice %56 {offsets = [0, 0], sizes = [8, 16], strides = [1, 1]} : vector<8x32xf32> to vector<8x16xf32>
    %58 = vector.extract_strided_slice %56 {offsets = [0, 16], sizes = [8, 16], strides = [1, 1]} : vector<8x32xf32> to vector<8x16xf32>
    %c0_39 = arith.constant 0 : index
    %c0_40 = arith.constant 0 : index
    %59 = vector.load %arg10[%c0_39, %c0_40] : memref<16x8xf32, #tpu.memory_space<vmem>>, vector<16x8xf32>
    %cst_41 = arith.constant dense<0.000000e+00> : vector<16x16xf32>
    %60 = tpu.matmul %59, %57, %cst_41 {dimension_numbers = #tpu.dot_dimension_numbers<[1], [0], [0], [1], [0, 0, 1, 1], [], []>} : vector<16x8xf32>, vector<8x16xf32>, vector<16x16xf32> -> vector<16x16xf32>
    %c0_42 = arith.constant 0 : index
    %c0_43 = arith.constant 0 : index
    %61 = vector.load %arg11[%c0_42, %c0_43] : memref<16x1xf32, #tpu.memory_space<vmem>>, vector<16x1xf32>
    %62 = vector.broadcast %61 : vector<16x1xf32> to vector<16x16xf32>
    %63 = arith.addf %60, %62 : vector<16x16xf32>
    %64 = arith.negf %63 : vector<16x16xf32>
    %65 = math.exp %64 : vector<16x16xf32>
    %cst_44 = arith.constant 1.000000e+00 : f32
    %66 = vector.broadcast %cst_44 : f32 to vector<16x16xf32>
    %67 = arith.addf %66, %65 : vector<16x16xf32>
    %68 = arith.divf %66, %67 : vector<16x16xf32>
    %c0_45 = arith.constant 0 : index
    %c0_46 = arith.constant 0 : index
    %69 = vector.load %arg12[%c0_45, %c0_46] : memref<16x8xf32, #tpu.memory_space<vmem>>, vector<16x8xf32>
    %cst_47 = arith.constant dense<0.000000e+00> : vector<16x16xf32>
    %70 = tpu.matmul %69, %58, %cst_47 {dimension_numbers = #tpu.dot_dimension_numbers<[1], [0], [0], [1], [0, 0, 1, 1], [], []>} : vector<16x8xf32>, vector<8x16xf32>, vector<16x16xf32> -> vector<16x16xf32>
    %c0_48 = arith.constant 0 : index
    %c0_49 = arith.constant 0 : index
    %71 = vector.load %arg13[%c0_48, %c0_49] : memref<16x1xf32, #tpu.memory_space<vmem>>, vector<16x1xf32>
    %72 = vector.broadcast %71 : vector<16x1xf32> to vector<16x16xf32>
    %73 = arith.addf %70, %72 : vector<16x16xf32>
    %74 = arith.negf %73 : vector<16x16xf32>
    %75 = math.exp %74 : vector<16x16xf32>
    %cst_50 = arith.constant 1.000000e+00 : f32
    %76 = vector.broadcast %cst_50 : f32 to vector<16x16xf32>
    %77 = arith.addf %76, %75 : vector<16x16xf32>
    %78 = arith.divf %76, %77 : vector<16x16xf32>
    %c0_51 = arith.constant 0 : index
    %c0_52 = arith.constant 0 : index
    %79 = vector.load %arg16[%c0_51, %c0_52] : memref<16x256xf32, #tpu.memory_space<vmem>>, vector<16x256xf32>
    %cst_53 = arith.constant dense<0.000000e+00> : vector<16x256xf32>
    %80 = tpu.matmul %68, %79, %cst_53 {dimension_numbers = #tpu.dot_dimension_numbers<[1], [0], [0], [1], [0, 0, 1, 1], [], []>} : vector<16x16xf32>, vector<16x256xf32>, vector<16x256xf32> -> vector<16x256xf32>
    %c0_54 = arith.constant 0 : index
    %c0_55 = arith.constant 0 : index
    %81 = vector.load %arg17[%c0_54, %c0_55] : memref<16x256xf32, #tpu.memory_space<vmem>>, vector<16x256xf32>
    %cst_56 = arith.constant dense<0.000000e+00> : vector<16x256xf32>
    %82 = tpu.matmul %78, %81, %cst_56 {dimension_numbers = #tpu.dot_dimension_numbers<[1], [0], [0], [1], [0, 0, 1, 1], [], []>} : vector<16x16xf32>, vector<16x256xf32>, vector<16x256xf32> -> vector<16x256xf32>
    %83 = arith.mulf %37, %80 : vector<16x256xf32>
    %84 = arith.mulf %83, %82 : vector<16x256xf32>
    %85 = arith.addf %84, %1 : vector<16x256xf32>
    %cst_57 = arith.constant 0.000000e+00 : f32
    %86 = vector.broadcast %cst_57 : f32 to vector<16x256xf32>
    %87 = arith.maximumf %85, %86 : vector<16x256xf32>
    %c0_58 = arith.constant 0 : index
    %c0_59 = arith.constant 0 : index
    %c0_60 = arith.constant 0 : index
    %88 = vector.load %arg20[%c0_58, %c0_59, %c0_60] : memref<1x16x256xf32, #tpu.memory_space<vmem>>, vector<1x16x256xf32>
    %89 = vector.shape_cast %88 : vector<1x16x256xf32> to vector<16x256xf32>
    %90 = vector.shape_cast %87 : vector<16x256xf32> to vector<1x16x256xf32>
    tpu.vector_store %arg20[%c0_58, %c0_59, %c0_60], %90 {strides = array<i32>} : memref<1x16x256xf32, #tpu.memory_space<vmem>>, vector<1x16x256xf32>,
    return
  }
  func.func @transform_0(%arg0: i32) -> (i32, i32, i32) {
    %c0_i32 = arith.constant 0 : i32
    %c0_i32_0 = arith.constant 0 : i32
    %c0_i32_1 = arith.constant 0 : i32
    return %arg0, %c0_i32, %c0_i32_0 : i32, i32, i32
  }
  func.func @transform_1(%arg0: i32) -> (i32, i32) {
    %c0_i32 = arith.constant 0 : i32
    %c0_i32_0 = arith.constant 0 : i32
    %c0_i32_1 = arith.constant 0 : i32
    return %c0_i32, %c0_i32_0 : i32, i32
  }
  func.func @transform_2(%arg0: i32) -> (i32, i32) {
    %c0_i32 = arith.constant 0 : i32
    %c0_i32_0 = arith.constant 0 : i32
    %c0_i32_1 = arith.constant 0 : i32
    return %c0_i32, %c0_i32_0 : i32, i32
  }
  func.func @transform_3(%arg0: i32) -> (i32, i32) {
    %c0_i32 = arith.constant 0 : i32
    %c0_i32_0 = arith.constant 0 : i32
    %c0_i32_1 = arith.constant 0 : i32
    return %c0_i32, %c0_i32_0 : i32, i32
  }
  func.func @transform_4(%arg0: i32) -> (i32, i32) {
    %c0_i32 = arith.constant 0 : i32
    %c0_i32_0 = arith.constant 0 : i32
    %c0_i32_1 = arith.constant 0 : i32
    return %c0_i32, %c0_i32_0 : i32, i32
  }
  func.func @transform_5(%arg0: i32) -> (i32, i32) {
    %c0_i32 = arith.constant 0 : i32
    %c0_i32_0 = arith.constant 0 : i32
    %c0_i32_1 = arith.constant 0 : i32
    return %c0_i32, %c0_i32_0 : i32, i32
  }
  func.func @transform_6(%arg0: i32) -> (i32, i32) {
    %c0_i32 = arith.constant 0 : i32
    %c0_i32_0 = arith.constant 0 : i32
    %c0_i32_1 = arith.constant 0 : i32
    return %c0_i32, %c0_i32_0 : i32, i32
  }
  func.func @transform_7(%arg0: i32) -> (i32, i32) {
    %c0_i32 = arith.constant 0 : i32
    %c0_i32_0 = arith.constant 0 : i32
    %c0_i32_1 = arith.constant 0 : i32
    return %c0_i32, %c0_i32_0 : i32, i32
  }
  func.func @transform_8(%arg0: i32) -> (i32, i32) {
    %c0_i32 = arith.constant 0 : i32
    %c0_i32_0 = arith.constant 0 : i32
    %c0_i32_1 = arith.constant 0 : i32
    return %c0_i32, %c0_i32_0 : i32, i32
  }
  func.func @transform_9(%arg0: i32) -> (i32, i32) {
    %c0_i32 = arith.constant 0 : i32
    %c0_i32_0 = arith.constant 0 : i32
    %c0_i32_1 = arith.constant 0 : i32
    return %c0_i32, %c0_i32_0 : i32, i32
  }
  func.func @transform_10(%arg0: i32) -> (i32, i32) {
    %c0_i32 = arith.constant 0 : i32
    %c0_i32_0 = arith.constant 0 : i32
    %c0_i32_1 = arith.constant 0 : i32
    return %c0_i32, %c0_i32_0 : i32, i32
  }
  func.func @transform_11(%arg0: i32) -> (i32, i32) {
    %c0_i32 = arith.constant 0 : i32
    %c0_i32_0 = arith.constant 0 : i32
    %c0_i32_1 = arith.constant 0 : i32
    return %c0_i32, %c0_i32_0 : i32, i32
  }
  func.func @transform_12(%arg0: i32) -> (i32, i32) {
    %c0_i32 = arith.constant 0 : i32
    %c0_i32_0 = arith.constant 0 : i32
    %c0_i32_1 = arith.constant 0 : i32
    return %c0_i32, %c0_i32_0 : i32, i32
  }
  func.func @transform_13(%arg0: i32) -> (i32, i32) {
    %c0_i32 = arith.constant 0 : i32
    %c0_i32_0 = arith.constant 0 : i32
    %c0_i32_1 = arith.constant 0 : i32
    return %c0_i32, %c0_i32_0 : i32, i32
  }
  func.func @transform_14(%arg0: i32) -> (i32, i32) {
    %c0_i32 = arith.constant 0 : i32
    %c0_i32_0 = arith.constant 0 : i32
    %c0_i32_1 = arith.constant 0 : i32
    return %c0_i32, %c0_i32_0 : i32, i32
  }
  func.func @transform_15(%arg0: i32) -> (i32, i32) {
    %c0_i32 = arith.constant 0 : i32
    %c0_i32_0 = arith.constant 0 : i32
    %c0_i32_1 = arith.constant 0 : i32
    return %c0_i32, %c0_i32_0 : i32, i32
  }
  func.func @transform_16(%arg0: i32) -> (i32, i32) {
    %c0_i32 = arith.constant 0 : i32
    %c0_i32_0 = arith.constant 0 : i32
    %c0_i32_1 = arith.constant 0 : i32
    return %c0_i32, %c0_i32_0 : i32, i32
  }
  func.func @transform_17(%arg0: i32) -> (i32, i32) {
    %c0_i32 = arith.constant 0 : i32
    %c0_i32_0 = arith.constant 0 : i32
    %c0_i32_1 = arith.constant 0 : i32
    return %c0_i32, %c0_i32_0 : i32, i32
  }
  func.func @transform_18(%arg0: i32) -> (i32, i32) {
    %c0_i32 = arith.constant 0 : i32
    %c0_i32_0 = arith.constant 0 : i32
    %c0_i32_1 = arith.constant 0 : i32
    return %c0_i32, %c0_i32_0 : i32, i32
  }
  func.func @transform_19(%arg0: i32) -> (i32, i32, i32) {
    %c0_i32 = arith.constant 0 : i32
    %c0_i32_0 = arith.constant 0 : i32
    %c0_i32_1 = arith.constant 0 : i32
    return %arg0, %c0_i32, %c0_i32_0 : i32, i32, i32
  }
}

</mosaic_0001>

<llo_original>
// kernel: tpu_custom_call.1
$region0: #{tpu_custom_call.1}
  #allocation0 [shape = 'u32[]', space=smem, size = 0x4, offset = 0x4, fixed_abs, tag = 'smem constant byte address 0x4 - core index']
  #allocation1 [shape = 'u32[144,128]{1,0:T(1,128)}', space=vmem, size = 0x12000, scoped, tag = 'internal scratch']
  %s0 = inlined_call_operand.vmem [shape: f32[2,16,256], index: 0, kind: input, shape index: {}]
  %s1 = inlined_call_operand.vmem [shape: f32[4,16], index: 1, kind: input, shape index: {}]
  %s2 = inlined_call_operand.vmem [shape: f32[4,1], index: 2, kind: input, shape index: {}]
  %s3 = inlined_call_operand.vmem [shape: f32[4,36], index: 3, kind: input, shape index: {}]
  %s4 = inlined_call_operand.vmem [shape: f32[4,1], index: 4, kind: input, shape index: {}]
  %s5 = inlined_call_operand.vmem [shape: f32[16,4], index: 5, kind: input, shape index: {}]
  %s6 = inlined_call_operand.vmem [shape: f32[16,1], index: 6, kind: input, shape index: {}]
  %s7 = inlined_call_operand.vmem [shape: f32[8,16], index: 7, kind: input, shape index: {}]
  %s8 = inlined_call_operand.vmem [shape: f32[8,1], index: 8, kind: input, shape index: {}]
  %s9 = inlined_call_operand.vmem [shape: f32[16,8], index: 9, kind: input, shape index: {}]
  %s10 = inlined_call_operand.vmem [shape: f32[16,1], index: 10, kind: input, shape index: {}]
  %s11 = inlined_call_operand.vmem [shape: f32[16,8], index: 11, kind: input, shape index: {}]
  %s12 = inlined_call_operand.vmem [shape: f32[16,1], index: 12, kind: input, shape index: {}]
  %s13 = inlined_call_operand.vmem [shape: f32[256,16], index: 13, kind: input, shape index: {}]
  %s14 = inlined_call_operand.vmem [shape: f32[256,16], index: 14, kind: input, shape index: {}]
  %s15 = inlined_call_operand.vmem [shape: f32[16,256], index: 15, kind: input, shape index: {}]
  %s16 = inlined_call_operand.vmem [shape: f32[16,256], index: 16, kind: input, shape index: {}]
  %s17 = inlined_call_operand.vmem [shape: f32[1,256], index: 17, kind: input, shape index: {}]
  %s18 = inlined_call_operand.vmem [shape: f32[1,256], index: 18, kind: input, shape index: {}]
  %s19 = inlined_call_operand.hbm [shape: f32[2,16,256], index: 19, kind: output, shape index: {}]
  %s20 = sld [smem:[#allocation0]]
  $region109: #{tpu_custom_call.1} parent=0
    _
  %s22 = ssub.s32 1, %s20
  %s23 = scalar_select 0, %s22, %s20
  $region1: #{tpu_custom_call.1} parent=0
    #allocation2 [shape = 'u8[32768]{0}', space=vmem, size = 0x8000, scoped, tag = 'output window, operand 0']
    #allocation3 [shape = 's32[2]{0}', space=sflag, size = 0x8, scoped, tag = 'scoped memory for tpu_custom_call.1']
    %24 = vsyncpa [#allocation3], 0
    %s25 = scalar_lea.sflag [#allocation3], 1
    %26 = vsyncpa %s25, 0
    loop: start=0, step=1, limit=4
    $region2: #{tpu_custom_call.1} parent=1 // loop_pre_header
      _
    $region3: #{tpu_custom_call.1} parent=1 // loop_header
      %s28 = sphi 0, %s32
      %p29 = scmp.ge.s32.totalorder %s28, 4
      %s38 = sphi 0, %s40
      %s41 = sphi 0, %s38
      %s42 = sphi 0, %s41
      %s58 = sphi 0, %s42
      %s62 = sphi 0, %s62
      %s64 = sphi 0, %s62
      %s65 = sphi 0, %s64
      %s79 = sphi 0, %s65
      %s83 = sphi 0, %s83
      %s85 = sphi 0, %s83
      %s86 = sphi 0, %s85
      %s100 = sphi 0, %s86
      %s104 = sphi 0, %s104
      %s106 = sphi 0, %s104
      %s107 = sphi 0, %s106
      %s121 = sphi 0, %s107
      %s125 = sphi 0, %s125
      %s127 = sphi 0, %s125
      %s128 = sphi 0, %s127
      %s142 = sphi 0, %s128
      %s146 = sphi 0, %s146
      %s148 = sphi 0, %s146
      %s149 = sphi 0, %s148
      %s163 = sphi 0, %s149
      %s167 = sphi 0, %s167
      %s169 = sphi 0, %s167
      %s170 = sphi 0, %s169
      %s184 = sphi 0, %s170
      %s188 = sphi 0, %s188
      %s190 = sphi 0, %s188
      %s191 = sphi 0, %s190
      %s205 = sphi 0, %s191
      %s209 = sphi 0, %s209
      %s211 = sphi 0, %s209
      %s212 = sphi 0, %s211
      %s226 = sphi 0, %s212
      %s230 = sphi 0, %s230
      %s232 = sphi 0, %s230
      %s233 = sphi 0, %s232
      %s247 = sphi 0, %s233
      %s251 = sphi 0, %s251
      %s253 = sphi 0, %s251
      %s254 = sphi 0, %s253
      %s268 = sphi 0, %s254
      %s272 = sphi 0, %s272
      %s274 = sphi 0, %s272
      %s275 = sphi 0, %s274
      %s289 = sphi 0, %s275
      %s293 = sphi 0, %s293
      %s295 = sphi 0, %s293
      %s296 = sphi 0, %s295
      %s310 = sphi 0, %s296
      %s314 = sphi 0, %s314
      %s316 = sphi 0, %s314
      %s317 = sphi 0, %s316
      %s331 = sphi 0, %s317
      %s335 = sphi 0, %s335
      %s337 = sphi 0, %s335
      %s338 = sphi 0, %s337
      %s352 = sphi 0, %s338
      %s356 = sphi 0, %s356
      %s358 = sphi 0, %s356
      %s359 = sphi 0, %s358
      %s373 = sphi 0, %s359
      %s377 = sphi 0, %s377
      %s379 = sphi 0, %s377
      %s380 = sphi 0, %s379
      %s394 = sphi 0, %s380
      %s398 = sphi 0, %s398
      %s400 = sphi 0, %s398
      %s401 = sphi 0, %s400
      %s415 = sphi 0, %s401
      %s419 = sphi 0, %s419
      %s421 = sphi 0, %s419
      %s422 = sphi 0, %s421
      %s436 = sphi 0, %s422
      %s442 = sphi 0, %s444
      %s445 = sphi 0, %s442
      %s446 = sphi 0, %s445
      %s462 = sphi 0, %s446
    $region4: #{tpu_custom_call.1} parent=1 // loop_header_branch
      %31 = sbr.rel (%p29) target = $region8
    $region5: #{tpu_custom_call.1} parent=1 // loop_body
      %s33 = ssub.s32 %s28, 1
      %s34 = ssub.s32 %s28, 2
      %s35 = sadd.s32 %s28, 1
      %s36 = ssub.s32 %s28, %s35
      %p37 = scmp.eq.s32.totalorder %s36, 0
      %s39 = sadd.s32 %s38, 1
      %s40 = scalar_select %p37, %s38, %s39
      %p43 = pneg %p37
      %p44 = scmp.eq.s32.totalorder %s28, 1
      %p45 = por %p43, %p44
      %p46 = scmp.ne.s32.totalorder %s38, %s41
      %p47 = scmp.eq.s32.totalorder %s28, 0
      %p48 = por %p46, %p47
      %p49 = scmp.ne.s32.totalorder %s38, %s41
      %p50 = scmp.eq.s32.totalorder %s33, 1
      %p51 = por %p49, %p50
      %p52 = scmp.ne.s32.totalorder %s41, %s42
      %p53 = scmp.eq.s32.totalorder %s33, 0
      %p54 = por %p52, %p53
      %p55 = scmp.ne.s32.totalorder %s41, %s42
      %p56 = scmp.eq.s32.totalorder %s34, 1
      %p57 = por %p55, %p56
      %p59 = scmp.ne.s32.totalorder %s42, %s58
      %p60 = scmp.eq.s32.totalorder %s34, 0
      %p61 = por %p59, %p60
      %s63 = sadd.s32 %s62, 1
      %p66 = scmp.eq.s32.totalorder %s28, 1
      %p67 = scmp.ne.s32.totalorder %s62, %s64
      %p68 = scmp.eq.s32.totalorder %s28, 0
      %p69 = por %p67, %p68
      %p70 = scmp.ne.s32.totalorder %s62, %s64
      %p71 = scmp.eq.s32.totalorder %s33, 1
      %p72 = por %p70, %p71
      %p73 = scmp.ne.s32.totalorder %s64, %s65
      %p74 = scmp.eq.s32.totalorder %s33, 0
      %p75 = por %p73, %p74
      %p76 = scmp.ne.s32.totalorder %s64, %s65
      %p77 = scmp.eq.s32.totalorder %s34, 1
      %p78 = por %p76, %p77
      %p80 = scmp.ne.s32.totalorder %s65, %s79
      %p81 = scmp.eq.s32.totalorder %s34, 0
      %p82 = por %p80, %p81
      %s84 = sadd.s32 %s83, 1
      %p87 = scmp.eq.s32.totalorder %s28, 1
      %p88 = scmp.ne.s32.totalorder %s83, %s85
      %p89 = scmp.eq.s32.totalorder %s28, 0
      %p90 = por %p88, %p89
      %p91 = scmp.ne.s32.totalorder %s83, %s85
      %p92 = scmp.eq.s32.totalorder %s33, 1
      %p93 = por %p91, %p92
      %p94 = scmp.ne.s32.totalorder %s85, %s86
      %p95 = scmp.eq.s32.totalorder %s33, 0
      %p96 = por %p94, %p95
      %p97 = scmp.ne.s32.totalorder %s85, %s86
      %p98 = scmp.eq.s32.totalorder %s34, 1
      %p99 = por %p97, %p98
      %p101 = scmp.ne.s32.totalorder %s86, %s100
      %p102 = scmp.eq.s32.totalorder %s34, 0
      %p103 = por %p101, %p102
      %s105 = sadd.s32 %s104, 1
      %p108 = scmp.eq.s32.totalorder %s28, 1
      %p109 = scmp.ne.s32.totalorder %s104, %s106
      %p110 = scmp.eq.s32.totalorder %s28, 0
      %p111 = por %p109, %p110
      %p112 = scmp.ne.s32.totalorder %s104, %s106
      %p113 = scmp.eq.s32.totalorder %s33, 1
      %p114 = por %p112, %p113
      %p115 = scmp.ne.s32.totalorder %s106, %s107
      %p116 = scmp.eq.s32.totalorder %s33, 0
      %p117 = por %p115, %p116
      %p118 = scmp.ne.s32.totalorder %s106, %s107
      %p119 = scmp.eq.s32.totalorder %s34, 1
      %p120 = por %p118, %p119
      %p122 = scmp.ne.s32.totalorder %s107, %s121
      %p123 = scmp.eq.s32.totalorder %s34, 0
      %p124 = por %p122, %p123
      %s126 = sadd.s32 %s125, 1
      %p129 = scmp.eq.s32.totalorder %s28, 1
      %p130 = scmp.ne.s32.totalorder %s125, %s127
      %p131 = scmp.eq.s32.totalorder %s28, 0
      %p132 = por %p130, %p131
      %p133 = scmp.ne.s32.totalorder %s125, %s127
      %p134 = scmp.eq.s32.totalorder %s33, 1
      %p135 = por %p133, %p134
      %p136 = scmp.ne.s32.totalorder %s127, %s128
      %p137 = scmp.eq.s32.totalorder %s33, 0
      %p138 = por %p136, %p137
      %p139 = scmp.ne.s32.totalorder %s127, %s128
      %p140 = scmp.eq.s32.totalorder %s34, 1
      %p141 = por %p139, %p140
      %p143 = scmp.ne.s32.totalorder %s128, %s142
      %p144 = scmp.eq.s32.totalorder %s34, 0
      %p145 = por %p143, %p144
      %s147 = sadd.s32 %s146, 1
      %p150 = scmp.eq.s32.totalorder %s28, 1
      %p151 = scmp.ne.s32.totalorder %s146, %s148
      %p152 = scmp.eq.s32.totalorder %s28, 0
      %p153 = por %p151, %p152
      %p154 = scmp.ne.s32.totalorder %s146, %s148
      %p155 = scmp.eq.s32.totalorder %s33, 1
      %p156 = por %p154, %p155
      %p157 = scmp.ne.s32.totalorder %s148, %s149
      %p158 = scmp.eq.s32.totalorder %s33, 0
      %p159 = por %p157, %p158
      %p160 = scmp.ne.s32.totalorder %s148, %s149
      %p161 = scmp.eq.s32.totalorder %s34, 1
      %p162 = por %p160, %p161
      %p164 = scmp.ne.s32.totalorder %s149, %s163
      %p165 = scmp.eq.s32.totalorder %s34, 0
      %p166 = por %p164, %p165
      %s168 = sadd.s32 %s167, 1
      %p171 = scmp.eq.s32.totalorder %s28, 1
      %p172 = scmp.ne.s32.totalorder %s167, %s169
      %p173 = scmp.eq.s32.totalorder %s28, 0
      %p174 = por %p172, %p173
      %p175 = scmp.ne.s32.totalorder %s167, %s169
      %p176 = scmp.eq.s32.totalorder %s33, 1
      %p177 = por %p175, %p176
      %p178 = scmp.ne.s32.totalorder %s169, %s170
      %p179 = scmp.eq.s32.totalorder %s33, 0
      %p180 = por %p178, %p179
      %p181 = scmp.ne.s32.totalorder %s169, %s170
      %p182 = scmp.eq.s32.totalorder %s34, 1
      %p183 = por %p181, %p182
      %p185 = scmp.ne.s32.totalorder %s170, %s184
      %p186 = scmp.eq.s32.totalorder %s34, 0
      %p187 = por %p185, %p186
      %s189 = sadd.s32 %s188, 1
      %p192 = scmp.eq.s32.totalorder %s28, 1
      %p193 = scmp.ne.s32.totalorder %s188, %s190
      %p194 = scmp.eq.s32.totalorder %s28, 0
      %p195 = por %p193, %p194
      %p196 = scmp.ne.s32.totalorder %s188, %s190
      %p197 = scmp.eq.s32.totalorder %s33, 1
      %p198 = por %p196, %p197
      %p199 = scmp.ne.s32.totalorder %s190, %s191
      %p200 = scmp.eq.s32.totalorder %s33, 0
      %p201 = por %p199, %p200
      %p202 = scmp.ne.s32.totalorder %s190, %s191
      %p203 = scmp.eq.s32.totalorder %s34, 1
      %p204 = por %p202, %p203
      %p206 = scmp.ne.s32.totalorder %s191, %s205
      %p207 = scmp.eq.s32.totalorder %s34, 0
      %p208 = por %p206, %p207
      %s210 = sadd.s32 %s209, 1
      %p213 = scmp.eq.s32.totalorder %s28, 1
      %p214 = scmp.ne.s32.totalorder %s209, %s211
      %p215 = scmp.eq.s32.totalorder %s28, 0
      %p216 = por %p214, %p215
      %p217 = scmp.ne.s32.totalorder %s209, %s211
      %p218 = scmp.eq.s32.totalorder %s33, 1
      %p219 = por %p217, %p218
      %p220 = scmp.ne.s32.totalorder %s211, %s212
      %p221 = scmp.eq.s32.totalorder %s33, 0
      %p222 = por %p220, %p221
      %p223 = scmp.ne.s32.totalorder %s211, %s212
      %p224 = scmp.eq.s32.totalorder %s34, 1
      %p225 = por %p223, %p224
      %p227 = scmp.ne.s32.totalorder %s212, %s226
      %p228 = scmp.eq.s32.totalorder %s34, 0
      %p229 = por %p227, %p228
      %s231 = sadd.s32 %s230, 1
      %p234 = scmp.eq.s32.totalorder %s28, 1
      %p235 = scmp.ne.s32.totalorder %s230, %s232
      %p236 = scmp.eq.s32.totalorder %s28, 0
      %p237 = por %p235, %p236
      %p238 = scmp.ne.s32.totalorder %s230, %s232
      %p239 = scmp.eq.s32.totalorder %s33, 1
      %p240 = por %p238, %p239
      %p241 = scmp.ne.s32.totalorder %s232, %s233
      %p242 = scmp.eq.s32.totalorder %s33, 0
      %p243 = por %p241, %p242
      %p244 = scmp.ne.s32.totalorder %s232, %s233
      %p245 = scmp.eq.s32.totalorder %s34, 1
      %p246 = por %p244, %p245
      %p248 = scmp.ne.s32.totalorder %s233, %s247
      %p249 = scmp.eq.s32.totalorder %s34, 0
      %p250 = por %p248, %p249
      %s252 = sadd.s32 %s251, 1
      %p255 = scmp.eq.s32.totalorder %s28, 1
      %p256 = scmp.ne.s32.totalorder %s251, %s253
      %p257 = scmp.eq.s32.totalorder %s28, 0
      %p258 = por %p256, %p257
      %p259 = scmp.ne.s32.totalorder %s251, %s253
      %p260 = scmp.eq.s32.totalorder %s33, 1
      %p261 = por %p259, %p260
      %p262 = scmp.ne.s32.totalorder %s253, %s254
      %p263 = scmp.eq.s32.totalorder %s33, 0
      %p264 = por %p262, %p263
      %p265 = scmp.ne.s32.totalorder %s253, %s254
      %p266 = scmp.eq.s32.totalorder %s34, 1
      %p267 = por %p265, %p266
      %p269 = scmp.ne.s32.totalorder %s254, %s268
      %p270 = scmp.eq.s32.totalorder %s34, 0
      %p271 = por %p269, %p270
      %s273 = sadd.s32 %s272, 1
      %p276 = scmp.eq.s32.totalorder %s28, 1
      %p277 = scmp.ne.s32.totalorder %s272, %s274
      %p278 = scmp.eq.s32.totalorder %s28, 0
      %p279 = por %p277, %p278
      %p280 = scmp.ne.s32.totalorder %s272, %s274
      %p281 = scmp.eq.s32.totalorder %s33, 1
      %p282 = por %p280, %p281
      %p283 = scmp.ne.s32.totalorder %s274, %s275
      %p284 = scmp.eq.s32.totalorder %s33, 0
      %p285 = por %p283, %p284
      %p286 = scmp.ne.s32.totalorder %s274, %s275
      %p287 = scmp.eq.s32.totalorder %s34, 1
      %p288 = por %p286, %p287
      %p290 = scmp.ne.s32.totalorder %s275, %s289
      %p291 = scmp.eq.s32.totalorder %s34, 0
      %p292 = por %p290, %p291
      %s294 = sadd.s32 %s293, 1
      %p297 = scmp.eq.s32.totalorder %s28, 1
      %p298 = scmp.ne.s32.totalorder %s293, %s295
      %p299 = scmp.eq.s32.totalorder %s28, 0
      %p300 = por %p298, %p299
      %p301 = scmp.ne.s32.totalorder %s293, %s295
      %p302 = scmp.eq.s32.totalorder %s33, 1
      %p303 = por %p301, %p302
      %p304 = scmp.ne.s32.totalorder %s295, %s296
      %p305 = scmp.eq.s32.totalorder %s33, 0
      %p306 = por %p304, %p305
      %p307 = scmp.ne.s32.totalorder %s295, %s296
      %p308 = scmp.eq.s32.totalorder %s34, 1
      %p309 = por %p307, %p308
      %p311 = scmp.ne.s32.totalorder %s296, %s310
      %p312 = scmp.eq.s32.totalorder %s34, 0
      %p313 = por %p311, %p312
      %s315 = sadd.s32 %s314, 1
      %p318 = scmp.eq.s32.totalorder %s28, 1
      %p319 = scmp.ne.s32.totalorder %s314, %s316
      %p320 = scmp.eq.s32.totalorder %s28, 0
      %p321 = por %p319, %p320
      %p322 = scmp.ne.s32.totalorder %s314, %s316
      %p323 = scmp.eq.s32.totalorder %s33, 1
      %p324 = por %p322, %p323
      %p325 = scmp.ne.s32.totalorder %s316, %s317
      %p326 = scmp.eq.s32.totalorder %s33, 0
      %p327 = por %p325, %p326
      %p328 = scmp.ne.s32.totalorder %s316, %s317
      %p329 = scmp.eq.s32.totalorder %s34, 1
      %p330 = por %p328, %p329
      %p332 = scmp.ne.s32.totalorder %s317, %s331
      %p333 = scmp.eq.s32.totalorder %s34, 0
      %p334 = por %p332, %p333
      %s336 = sadd.s32 %s335, 1
      %p339 = scmp.eq.s32.totalorder %s28, 1
      %p340 = scmp.ne.s32.totalorder %s335, %s337
      %p341 = scmp.eq.s32.totalorder %s28, 0
      %p342 = por %p340, %p341
      %p343 = scmp.ne.s32.totalorder %s335, %s337
      %p344 = scmp.eq.s32.totalorder %s33, 1
      %p345 = por %p343, %p344
      %p346 = scmp.ne.s32.totalorder %s337, %s338
      %p347 = scmp.eq.s32.totalorder %s33, 0
      %p348 = por %p346, %p347
      %p349 = scmp.ne.s32.totalorder %s337, %s338
      %p350 = scmp.eq.s32.totalorder %s34, 1
      %p351 = por %p349, %p350
      %p353 = scmp.ne.s32.totalorder %s338, %s352
      %p354 = scmp.eq.s32.totalorder %s34, 0
      %p355 = por %p353, %p354
      %s357 = sadd.s32 %s356, 1
      %p360 = scmp.eq.s32.totalorder %s28, 1
      %p361 = scmp.ne.s32.totalorder %s356, %s358
      %p362 = scmp.eq.s32.totalorder %s28, 0
      %p363 = por %p361, %p362
      %p364 = scmp.ne.s32.totalorder %s356, %s358
      %p365 = scmp.eq.s32.totalorder %s33, 1
      %p366 = por %p364, %p365
      %p367 = scmp.ne.s32.totalorder %s358, %s359
      %p368 = scmp.eq.s32.totalorder %s33, 0
      %p369 = por %p367, %p368
      %p370 = scmp.ne.s32.totalorder %s358, %s359
      %p371 = scmp.eq.s32.totalorder %s34, 1
      %p372 = por %p370, %p371
      %p374 = scmp.ne.s32.totalorder %s359, %s373
      %p375 = scmp.eq.s32.totalorder %s34, 0
      %p376 = por %p374, %p375
      %s378 = sadd.s32 %s377, 1
      %p381 = scmp.eq.s32.totalorder %s28, 1
      %p382 = scmp.ne.s32.totalorder %s377, %s379
      %p383 = scmp.eq.s32.totalorder %s28, 0
      %p384 = por %p382, %p383
      %p385 = scmp.ne.s32.totalorder %s377, %s379
      %p386 = scmp.eq.s32.totalorder %s33, 1
      %p387 = por %p385, %p386
      %p388 = scmp.ne.s32.totalorder %s379, %s380
      %p389 = scmp.eq.s32.totalorder %s33, 0
      %p390 = por %p388, %p389
      %p391 = scmp.ne.s32.totalorder %s379, %s380
      %p392 = scmp.eq.s32.totalorder %s34, 1
      %p393 = por %p391, %p392
      %p395 = scmp.ne.s32.totalorder %s380, %s394
      %p396 = scmp.eq.s32.totalorder %s34, 0
      %p397 = por %p395, %p396
      %s399 = sadd.s32 %s398, 1
      %p402 = scmp.eq.s32.totalorder %s28, 1
      %p403 = scmp.ne.s32.totalorder %s398, %s400
      %p404 = scmp.eq.s32.totalorder %s28, 0
      %p405 = por %p403, %p404
      %p406 = scmp.ne.s32.totalorder %s398, %s400
      %p407 = scmp.eq.s32.totalorder %s33, 1
      %p408 = por %p406, %p407
      %p409 = scmp.ne.s32.totalorder %s400, %s401
      %p410 = scmp.eq.s32.totalorder %s33, 0
      %p411 = por %p409, %p410
      %p412 = scmp.ne.s32.totalorder %s400, %s401
      %p413 = scmp.eq.s32.totalorder %s34, 1
      %p414 = por %p412, %p413
      %p416 = scmp.ne.s32.totalorder %s401, %s415
      %p417 = scmp.eq.s32.totalorder %s34, 0
      %p418 = por %p416, %p417
      %s420 = sadd.s32 %s419, 1
      %p423 = scmp.eq.s32.totalorder %s28, 1
      %p424 = scmp.ne.s32.totalorder %s419, %s421
      %p425 = scmp.eq.s32.totalorder %s28, 0
      %p426 = por %p424, %p425
      %p427 = scmp.ne.s32.totalorder %s419, %s421
      %p428 = scmp.eq.s32.totalorder %s33, 1
      %p429 = por %p427, %p428
      %p430 = scmp.ne.s32.totalorder %s421, %s422
      %p431 = scmp.eq.s32.totalorder %s33, 0
      %p432 = por %p430, %p431
      %p433 = scmp.ne.s32.totalorder %s421, %s422
      %p434 = scmp.eq.s32.totalorder %s34, 1
      %p435 = por %p433, %p434
      %p437 = scmp.ne.s32.totalorder %s422, %s436
      %p438 = scmp.eq.s32.totalorder %s34, 0
      %p439 = por %p437, %p438
      %s440 = ssub.s32 %s28, %s35
      %p441 = scmp.eq.s32.totalorder %s440, 0
      %s443 = sadd.s32 %s442, 1
      %s444 = scalar_select %p441, %s442, %s443
      %p447 = pneg %p441
      %p448 = scmp.eq.s32.totalorder %s28, 1
      %p449 = por %p447, %p448
      %p450 = scmp.ne.s32.totalorder %s442, %s445
      %p451 = scmp.eq.s32.totalorder %s28, 0
      %p452 = por %p450, %p451
      %p453 = scmp.ne.s32.totalorder %s442, %s445
      %p454 = scmp.eq.s32.totalorder %s33, 1
      %p455 = por %p453, %p454
      %p456 = scmp.ne.s32.totalorder %s445, %s446
      %p457 = scmp.eq.s32.totalorder %s33, 0
      %p458 = por %p456, %p457
      %p459 = scmp.ne.s32.totalorder %s445, %s446
      %p460 = scmp.eq.s32.totalorder %s34, 1
      %p461 = por %p459, %p460
      %p463 = scmp.ne.s32.totalorder %s446, %s462
      %p464 = scmp.eq.s32.totalorder %s34, 0
      %p465 = por %p463, %p464
      %p466 = scmp.le.s32.totalorder 1, %s28
      %p467 = scmp.lt.s32.totalorder %s28, 3
      %p468 = pnand %p466, %p467
      %p469 = pneg %p468
      // Predicated region
      $region9: #{tpu_custom_call.1} parent=5 // pred_check
        _
      $region10: #{tpu_custom_call.1} parent=5 // pred_check_branch
        %471 = sbr.rel (%p468) target = $region12
      $region11: #{tpu_custom_call.1} parent=5 // pred_region
        %s472 = ssub.s32 %s28, 1
        // Predicated region
        $region13: #{tpu_custom_call.1} parent=11 // pred_check
          %p473 = pneg %p75
        $region14: #{tpu_custom_call.1} parent=11 // pred_check_branch
          %475 = sbr.rel (%p473) target = $region16
        $region15: #{tpu_custom_call.1} parent=11 // pred_region
          _
        $region16: #{tpu_custom_call.1} parent=11 // pred_fallthru
          _
        // Predicated region
        $region17: #{tpu_custom_call.1} parent=11 // pred_check
          %p476 = pneg %p96
        $region18: #{tpu_custom_call.1} parent=11 // pred_check_branch
          %478 = sbr.rel (%p476) target = $region20
        $region19: #{tpu_custom_call.1} parent=11 // pred_region
          _
        $region20: #{tpu_custom_call.1} parent=11 // pred_fallthru
          _
        // Predicated region
        $region21: #{tpu_custom_call.1} parent=11 // pred_check
          %p479 = pneg %p117
        $region22: #{tpu_custom_call.1} parent=11 // pred_check_branch
          %481 = sbr.rel (%p479) target = $region24
        $region23: #{tpu_custom_call.1} parent=11 // pred_region
          _
        $region24: #{tpu_custom_call.1} parent=11 // pred_fallthru
          _
        // Predicated region
        $region25: #{tpu_custom_call.1} parent=11 // pred_check
          %p482 = pneg %p138
        $region26: #{tpu_custom_call.1} parent=11 // pred_check_branch
          %484 = sbr.rel (%p482) target = $region28
        $region27: #{tpu_custom_call.1} parent=11 // pred_region
          _
        $region28: #{tpu_custom_call.1} parent=11 // pred_fallthru
          _
        // Predicated region
        $region29: #{tpu_custom_call.1} parent=11 // pred_check
          %p485 = pneg %p159
        $region30: #{tpu_custom_call.1} parent=11 // pred_check_branch
          %487 = sbr.rel (%p485) target = $region32
        $region31: #{tpu_custom_call.1} parent=11 // pred_region
          _
        $region32: #{tpu_custom_call.1} parent=11 // pred_fallthru
          _
        // Predicated region
        $region33: #{tpu_custom_call.1} parent=11 // pred_check
          %p488 = pneg %p180
        $region34: #{tpu_custom_call.1} parent=11 // pred_check_branch
          %490 = sbr.rel (%p488) target = $region36
        $region35: #{tpu_custom_call.1} parent=11 // pred_region
          _
        $region36: #{tpu_custom_call.1} parent=11 // pred_fallthru
          _
        // Predicated region
        $region37: #{tpu_custom_call.1} parent=11 // pred_check
          %p491 = pneg %p201
        $region38: #{tpu_custom_call.1} parent=11 // pred_check_branch
          %493 = sbr.rel (%p491) target = $region40
        $region39: #{tpu_custom_call.1} parent=11 // pred_region
          _
        $region40: #{tpu_custom_call.1} parent=11 // pred_fallthru
          _
        // Predicated region
        $region41: #{tpu_custom_call.1} parent=11 // pred_check
          %p494 = pneg %p222
        $region42: #{tpu_custom_call.1} parent=11 // pred_check_branch
          %496 = sbr.rel (%p494) target = $region44
        $region43: #{tpu_custom_call.1} parent=11 // pred_region
          _
        $region44: #{tpu_custom_call.1} parent=11 // pred_fallthru
          _
        // Predicated region
        $region45: #{tpu_custom_call.1} parent=11 // pred_check
          %p497 = pneg %p243
        $region46: #{tpu_custom_call.1} parent=11 // pred_check_branch
          %499 = sbr.rel (%p497) target = $region48
        $region47: #{tpu_custom_call.1} parent=11 // pred_region
          _
        $region48: #{tpu_custom_call.1} parent=11 // pred_fallthru
          _
        // Predicated region
        $region49: #{tpu_custom_call.1} parent=11 // pred_check
          %p500 = pneg %p264
        $region50: #{tpu_custom_call.1} parent=11 // pred_check_branch
          %502 = sbr.rel (%p500) target = $region52
        $region51: #{tpu_custom_call.1} parent=11 // pred_region
          _
        $region52: #{tpu_custom_call.1} parent=11 // pred_fallthru
          _
        // Predicated region
        $region53: #{tpu_custom_call.1} parent=11 // pred_check
          %p503 = pneg %p285
        $region54: #{tpu_custom_call.1} parent=11 // pred_check_branch
          %505 = sbr.rel (%p503) target = $region56
        $region55: #{tpu_custom_call.1} parent=11 // pred_region
          _
        $region56: #{tpu_custom_call.1} parent=11 // pred_fallthru
          _
        // Predicated region
        $region57: #{tpu_custom_call.1} parent=11 // pred_check
          %p506 = pneg %p306
        $region58: #{tpu_custom_call.1} parent=11 // pred_check_branch
          %508 = sbr.rel (%p506) target = $region60
        $region59: #{tpu_custom_call.1} parent=11 // pred_region
          _
        $region60: #{tpu_custom_call.1} parent=11 // pred_fallthru
          _
        // Predicated region
        $region61: #{tpu_custom_call.1} parent=11 // pred_check
          %p509 = pneg %p327
        $region62: #{tpu_custom_call.1} parent=11 // pred_check_branch
          %511 = sbr.rel (%p509) target = $region64
        $region63: #{tpu_custom_call.1} parent=11 // pred_region
          _
        $region64: #{tpu_custom_call.1} parent=11 // pred_fallthru
          _
        // Predicated region
        $region65: #{tpu_custom_call.1} parent=11 // pred_check
          %p512 = pneg %p348
        $region66: #{tpu_custom_call.1} parent=11 // pred_check_branch
          %514 = sbr.rel (%p512) target = $region68
        $region67: #{tpu_custom_call.1} parent=11 // pred_region
          _
        $region68: #{tpu_custom_call.1} parent=11 // pred_fallthru
          _
        // Predicated region
        $region69: #{tpu_custom_call.1} parent=11 // pred_check
          %p515 = pneg %p369
        $region70: #{tpu_custom_call.1} parent=11 // pred_check_branch
          %517 = sbr.rel (%p515) target = $region72
        $region71: #{tpu_custom_call.1} parent=11 // pred_region
          _
        $region72: #{tpu_custom_call.1} parent=11 // pred_fallthru
          _
        // Predicated region
        $region73: #{tpu_custom_call.1} parent=11 // pred_check
          %p518 = pneg %p390
        $region74: #{tpu_custom_call.1} parent=11 // pred_check_branch
          %520 = sbr.rel (%p518) target = $region76
        $region75: #{tpu_custom_call.1} parent=11 // pred_region
          _
        $region76: #{tpu_custom_call.1} parent=11 // pred_fallthru
          _
        // Predicated region
        $region77: #{tpu_custom_call.1} parent=11 // pred_check
          %p521 = pneg %p411
        $region78: #{tpu_custom_call.1} parent=11 // pred_check_branch
          %523 = sbr.rel (%p521) target = $region80
        $region79: #{tpu_custom_call.1} parent=11 // pred_region
          _
        $region80: #{tpu_custom_call.1} parent=11 // pred_fallthru
          _
        // Predicated region
        $region81: #{tpu_custom_call.1} parent=11 // pred_check
          %p524 = pneg %p432
        $region82: #{tpu_custom_call.1} parent=11 // pred_check_branch
          %526 = sbr.rel (%p524) target = $region84
        $region83: #{tpu_custom_call.1} parent=11 // pred_region
          _
        $region84: #{tpu_custom_call.1} parent=11 // pred_fallthru
          _
      $region12: #{tpu_custom_call.1} parent=5 // pred_fallthru
        _
      %p527 = scmp.lt.s32.totalorder %s28, 2
      // Predicated region
      $region85: #{tpu_custom_call.1} parent=5 // pred_check
        %p528 = pneg %p527
      $region86: #{tpu_custom_call.1} parent=5 // pred_check_branch
        %530 = sbr.rel (%p528) target = $region88
      $region87: #{tpu_custom_call.1} parent=5 // pred_region
        // Predicated region
        $region89: #{tpu_custom_call.1} parent=87 // pred_check
          %p531 = pneg %p48
        $region90: #{tpu_custom_call.1} parent=87 // pred_check_branch
          %533 = sbr.rel (%p531) target = $region92
        $region91: #{tpu_custom_call.1} parent=87 // pred_region
          %p534 = scmp.lt.s32.totalorder %s28, 1
          %s535 = scalar_select %p534, %s28, 1
          %s536 = smul.addr %s535, 4
          %s537 = smul.addr %s536, 8
          %s538 = scalar_lea.vmem %s0, %s537
        $region92: #{tpu_custom_call.1} parent=87 // pred_fallthru
          _
      $region88: #{tpu_custom_call.1} parent=5 // pred_fallthru
        _
      %p539 = scmp.le.s32.totalorder 1, %s28
      %p540 = scmp.lt.s32.totalorder %s28, 3
      %p541 = pnand %p539, %p540
      %p542 = pneg %p541
      // Predicated region
      $region93: #{tpu_custom_call.1} parent=5 // pred_check
        _
      $region94: #{tpu_custom_call.1} parent=5 // pred_check_branch
        %544 = sbr.rel (%p541) target = $region96
      $region95: #{tpu_custom_call.1} parent=5 // pred_region
        %s545 = ssub.s32 %s28, 1
        %p546 = scmp.lt.s32.totalorder %s33, 1
        %s547 = scalar_select %p546, %s33, 1
        %s548 = smul.addr %s547, 4
        %s549 = smul.addr %s548, 8
        %s550 = scalar_lea.vmem %s0, %s549
        %p551 = pneg %p54
        %p552 = pneg %p51
        %p553 = pneg %p75
        %p554 = pneg %p72
        %p555 = pneg %p96
        %p556 = pneg %p93
        %p557 = pneg %p117
        %p558 = pneg %p114
        %p559 = pneg %p138
        %p560 = pneg %p135
        %p561 = pneg %p159
        %p562 = pneg %p156
        %p563 = pneg %p180
        %p564 = pneg %p177
        %p565 = pneg %p201
        %p566 = pneg %p198
        %p567 = pneg %p222
        %p568 = pneg %p219
        %p569 = pneg %p243
        %p570 = pneg %p240
        %p571 = pneg %p264
        %p572 = pneg %p261
        %p573 = pneg %p285
        %p574 = pneg %p282
        %p575 = pneg %p306
        %p576 = pneg %p303
        %p577 = pneg %p327
        %p578 = pneg %p324
        %p579 = pneg %p348
        %p580 = pneg %p345
        %p581 = pneg %p369
        %p582 = pneg %p366
        %p583 = pneg %p390
        %p584 = pneg %p387
        %p585 = pneg %p411
        %p586 = pneg %p408
        %p587 = pneg %p432
        %p588 = pneg %p429
        %p589 = pneg %p458
        %p590 = pneg %p455
        %s591 = sand.u32 %s445, 1
        %s592 = scalar_lea.sflag [#allocation3], %s591
        %s593 = sand.u32 %s445, 1
        %s594 = smul.addr %s593, 32
        %s595 = scalar_lea.vmem [#allocation2], %s594
        %p596 = scmp.lt.s32.totalorder %s33, 1
        %s597 = scalar_select %p596, %s33, 1
        %s598 = smul.addr %s597, 4
        %s599 = smul.addr %s598, 8
        %s600 = scalar_lea.vmem %s0, %s599
        %v601 = vld [vmem:[%s600] sm:$0xff]
        %v602 = vld [vmem:[%s600 + $0x8] sm:$0xff]
        %v603 = vld [vmem:[%s600 + $0x10] sm:$0xff]
        %v604 = vld [vmem:[%s600 + $0x18] sm:$0xff]
        %v605 = vld [vmem:[%s1] sm:$0xf]
        %v606 = vld [vmem:[%s2] sm:$0xf]
        %608 = vset.pattern.permute.xlu0 0
        %609 = vperm.xlu0 %608, %v606
        %v610 = vpop.permute.xlu0 %609
        %vm612 = vcmask 130048
        %v614 = vsel %vm612, %v605, 0
        %616 = vmatprep.subr.mxu0 %v602
        %617 = vmatpush1.msra.mxu0 %v601
        %618 = vmatprep.subr.mxu0 %v604
        %619 = vmatpush1.msra.mxu0 %v603
        %620 = vmatprep.subr.mxu0 0.0
        %621 = vmatpush1.msra.mxu0 0.0
        %622 = vmatprep.subr.mxu0 0.0
        %623 = vmatpush1.msra.mxu0 0.0
        %624 = vmatprep.subr.mxu0 0.0
        %625 = vmatpush1.msra.mxu0 0.0
        %626 = vmatprep.subr.mxu0 0.0
        %627 = vmatpush1.msra.mxu0 0.0
        %628 = vmatprep.subr.mxu0 0.0
        %629 = vmatpush1.msra.mxu0 0.0
        %630 = vmatprep.subr.mxu0 0.0
        %631 = vmatpush1.msra.mxu0 0.0
        %632 = vmatprep.subr.mxu0 0.0
        %633 = vmatpush1.msra.mxu0 0.0
        %634 = vmatprep.subr.mxu0 0.0
        %635 = vmatpush1.msra.mxu0 0.0
        %636 = vmatprep.subr.mxu0 0.0
        %637 = vmatpush1.msra.mxu0 0.0
        %638 = vmatprep.subr.mxu0 0.0
        %639 = vmatpush1.msra.mxu0 0.0
        %640 = vmatprep.subr.mxu0 0.0
        %641 = vmatpush1.msra.mxu0 0.0
        %642 = vmatprep.subr.mxu0 0.0
        %643 = vmatpush1.msra.mxu0 0.0
        %644 = vmatprep.subr.mxu0 0.0
        %645 = vmatpush1.msra.mxu0 0.0
        %646 = vmatprep.subr.mxu0 0.0
        %647 = vmatpush1.msra.mxu0 0.0
        %648 = vmatprep.subr.mxu0 0.0
        %649 = vmatpush1.msra.mxu0 0.0
        %650 = vmatprep.subr.mxu0 0.0
        %651 = vmatpush1.msra.mxu0 0.0
        %652 = vmatprep.subr.mxu0 0.0
        %653 = vmatpush1.msra.mxu0 0.0
        %654 = vmatprep.subr.mxu0 0.0
        %655 = vmatpush1.msra.mxu0 0.0
        %656 = vmatprep.subr.mxu0 0.0
        %657 = vmatpush1.msra.mxu0 0.0
        %658 = vmatprep.subr.mxu0 0.0
        %659 = vmatpush1.msra.mxu0 0.0
        %660 = vmatprep.subr.mxu0 0.0
        %661 = vmatpush1.msra.mxu0 0.0
        %662 = vmatprep.subr.mxu0 0.0
        %663 = vmatpush1.msra.mxu0 0.0
        %664 = vmatprep.subr.mxu0 0.0
        %665 = vmatpush1.msra.mxu0 0.0
        %666 = vmatprep.subr.mxu0 0.0
        %667 = vmatpush1.msra.mxu0 0.0
        %668 = vmatprep.subr.mxu0 0.0
        %669 = vmatpush1.msra.mxu0 0.0
        %670 = vmatprep.subr.mxu0 0.0
        %671 = vmatpush1.msra.mxu0 0.0
        %672 = vmatprep.subr.mxu0 0.0
        %673 = vmatpush1.msra.mxu0 0.0
        %674 = vmatprep.subr.mxu0 0.0
        %675 = vmatpush1.msra.mxu0 0.0
        %676 = vmatprep.subr.mxu0 0.0
        %677 = vmatpush1.msra.mxu0 0.0
        %678 = vmatprep.subr.mxu0 0.0
        %679 = vmatpush1.msra.mxu0 0.0
        %680 = vmatprep.mubr.f32.mxu0 0.0
        %681 = vmatmul.mubr.f32.gmra.mrb[0].mxu0 %v614
        %v682 = vpop.f32.mrb[0].mxu0
        %v683 = vadd.f32 %v610, %v682
        %v684 = vpop.f32.mrb[0].mxu0
        %v685 = vadd.f32 %v610, %v684
        %686 = vdwg.mxu0
        %v687 = vmax.f32 %v683, 0.0
        %v688 = vmax.f32 %v685, 0.0
        %691 = vrot.lane.b32.xlu0 %v687, 16
        %v692 = vpop.permute.xlu0 %691
        %693 = vrot.lane.b32.xlu0 %v688, 16
        %v694 = vpop.permute.xlu0 %693
        %v695 = vsel %vm612, %v692, %v694
        %v699 = vsel %vm612, 0.0, %v692
        %v700 = vsel %vm612, %v694, 0.0
        %v701 = vld [vmem:[%s17] sm:$0x3]
        %v703 = vlaneseq
        %v704 = vshrl.u32 %v703, 7
        %v705 = vsub.s32 0, %v704
        %v706 = vrot.slane %v701, %v705
        %v707 = vlaneseq
        %v708 = vshrl.u32 %v707, 7
        %v709 = vsub.s32 1, %v708
        %v710 = vrot.slane %v701, %v709
        %711 = vrot.lane.b32.xlu0 %v706, 15
        %v712 = vpop.permute.xlu0 %711
        %713 = vrot.lane.b32.xlu0 %v710, 15
        %v714 = vpop.permute.xlu0 %713
        %vm715 = vcmask 121856
        %v716 = vsel %vm715, %v712, %v714
        %v720 = vmul.f32 %v699, %v712
        %v721 = vmul.f32 %v695, %v716
        %v722 = vmul.f32 %v700, %v714
        %v723 = vld [vmem:[%s18] sm:$0x3]
        %v725 = vlaneseq
        %v726 = vshrl.u32 %v725, 7
        %v727 = vsub.s32 0, %v726
        %v728 = vrot.slane %v723, %v727
        %v729 = vlaneseq
        %v730 = vshrl.u32 %v729, 7
        %v731 = vsub.s32 1, %v730
        %v732 = vrot.slane %v723, %v731
        %733 = vrot.lane.b32.xlu0 %v728, 17
        %v734 = vpop.permute.xlu0 %733
        %735 = vrot.lane.b32.xlu0 %v732, 17
        %v736 = vpop.permute.xlu0 %735
        %vm737 = vcmask 138240
        %v738 = vsel %vm737, %v734, %v736
        %v742 = vmul.f32 %v699, %v734
        %v743 = vmul.f32 %v695, %v738
        %v744 = vmul.f32 %v700, %v736
        %v745 = vrot.slane %v687, 4
        %v746 = vrot.slane %v688, 4
        %747 = vrot.lane.b32.xlu0 %v745, 15
        %v748 = vpop.permute.xlu0 %747
        %749 = vrot.lane.b32.xlu0 %v746, 15
        %v750 = vpop.permute.xlu0 %749
        %v751 = vsel %vm715, %v748, %v750
        %758 = vrot.lane.b32.xlu0 %v742, 126
        %v759 = vpop.permute.xlu0 %758
        %760 = vrot.lane.b32.xlu0 %v743, 126
        %v761 = vpop.permute.xlu0 %760
        %762 = vrot.lane.b32.xlu0 %v744, 126
        %v763 = vpop.permute.xlu0 %762
        %vm764 = vcmask 1031168
        %v765 = vsel %vm764, %v759, %v761
        %v766 = vsel %vm764, %v761, %v763
        %vm767 = vcmask 1043456
        %v768 = vsel %vm767, %v720, %v748
        %v769 = vsel %vm767, %v721, %v751
        %v770 = vsel %vm767, %v722, %v750
        %774 = vrot.lane.b32.xlu0 %v768, 1
        %v775 = vpop.permute.xlu0 %774
        %776 = vrot.lane.b32.xlu0 %v769, 1
        %v777 = vpop.permute.xlu0 %776
        %778 = vrot.lane.b32.xlu0 %v770, 1
        %v779 = vpop.permute.xlu0 %778
        %780 = vrot.lane.b32.xlu0 %v765, 1
        %v781 = vpop.permute.xlu0 %780
        %782 = vrot.lane.b32.xlu0 %v766, 1
        %v783 = vpop.permute.xlu0 %782
        %784 = vrot.lane.b32.xlu0 %v763, 1
        %v785 = vpop.permute.xlu0 %784
        %vm786 = vcmask 7168
        %v787 = vsel %vm786, %v775, %v777
        %v788 = vsel %vm786, %v777, %v779
        %v789 = vsel %vm786, %v781, %v783
        %v790 = vsel %vm786, %v783, %v785
        %v797 = vsel %vm612, 0.0, %v775
        %v798 = vsel %vm612, 0.0, %v781
        %v799 = vsel %vm612, %v788, 0.0
        %v800 = vsel %vm612, %v790, 0.0
        %v805 = vrot.slane %v797, 4
        %v806 = vrot.slane %v787, 4
        %v807 = vrot.slane %v799, 4
        %v808 = vrot.slane %v798, 4
        %v809 = vsel %vm767, %v805, %v808
        %v810 = vrot.slane %v789, 4
        %v811 = vsel %vm767, %v806, %v810
        %v812 = vrot.slane %v800, 4
        %v813 = vsel %vm767, %v807, %v812
        %814 = vrot.lane.b32.xlu0 %v805, 112
        %v815 = vpop.permute.xlu0 %814
        %816 = vrot.lane.b32.xlu0 %v806, 112
        %v817 = vpop.permute.xlu0 %816
        %818 = vrot.lane.b32.xlu0 %v807, 112
        %v819 = vpop.permute.xlu0 %818
        %820 = vrot.lane.b32.xlu0 %v809, 112
        %v821 = vpop.permute.xlu0 %820
        %822 = vrot.lane.b32.xlu0 %v811, 112
        %v823 = vpop.permute.xlu0 %822
        %824 = vrot.lane.b32.xlu0 %v813, 112
        %v825 = vpop.permute.xlu0 %824
        %vm826 = vcmask 916480
        %v827 = vsel %vm826, %v815, %v817
        %v828 = vsel %vm826, %v817, %v819
        %v829 = vsel %vm826, %v821, %v823
        %v830 = vsel %vm826, %v823, %v825
        %835 = vrot.lane.b32.xlu0 %v797, 96
        %v836 = vpop.permute.xlu0 %835
        %837 = vrot.lane.b32.xlu0 %v787, 96
        %v838 = vpop.permute.xlu0 %837
        %839 = vrot.lane.b32.xlu0 %v799, 96
        %v840 = vpop.permute.xlu0 %839
        %841 = vrot.lane.b32.xlu0 %v798, 96
        %v842 = vpop.permute.xlu0 %841
        %843 = vrot.lane.b32.xlu0 %v789, 96
        %v844 = vpop.permute.xlu0 %843
        %845 = vrot.lane.b32.xlu0 %v800, 96
        %v846 = vpop.permute.xlu0 %845
        %vm847 = vcmask 785408
        %v848 = vsel %vm847, %v836, %v838
        %v849 = vsel %vm847, %v838, %v840
        %v850 = vsel %vm847, %v842, %v844
        %v851 = vsel %vm847, %v844, %v846
        %v854 = vsel %vm767, %v798, %v827
        %v855 = vsel %vm767, %v789, %v828
        %v856 = vld [vmem:[%s3] sm:$0xf]
        %v857 = vld [vmem:[%s4] sm:$0xf]
        %859 = vset.pattern.permute.xlu0 0
        %860 = vperm.xlu0 %859, %v857
        %v861 = vpop.permute.xlu0 %860
        %vm863 = vcmask 293888
        %v865 = vsel %vm863, %v856, 0
        %v867 = vsel %vm767, %v850, 0
        %v869 = vsel %vm767, %v851, 0
        %871 = vmatprep.subr.mxu0 %v787
        %872 = vmatpush1.msra.mxu0 %v797
        %873 = vmatprep.subr.mxu0 %v855
        %874 = vmatpush1.msra.mxu0 %v854
        %875 = vmatprep.subr.mxu0 %v830
        %876 = vmatpush1.msra.mxu0 %v829
        %877 = vmatprep.subr.mxu0 %v849
        %878 = vmatpush1.msra.mxu0 %v848
        %879 = vmatprep.subr.mxu0 %v869
        %880 = vmatpush1.msra.mxu0 %v867
        %881 = vmatprep.subr.mxu0 0.0
        %882 = vmatpush1.msra.mxu0 0.0
        %883 = vmatprep.subr.mxu0 0.0
        %884 = vmatpush1.msra.mxu0 0.0
        %885 = vmatprep.subr.mxu0 0.0
        %886 = vmatpush1.msra.mxu0 0.0
        %887 = vmatprep.subr.mxu0 0.0
        %888 = vmatpush1.msra.mxu0 0.0
        %889 = vmatprep.subr.mxu0 0.0
        %890 = vmatpush1.msra.mxu0 0.0
        %891 = vmatprep.subr.mxu0 0.0
        %892 = vmatpush1.msra.mxu0 0.0
        %893 = vmatprep.subr.mxu0 0.0
        %894 = vmatpush1.msra.mxu0 0.0
        %895 = vmatprep.subr.mxu0 0.0
        %896 = vmatpush1.msra.mxu0 0.0
        %897 = vmatprep.subr.mxu0 0.0
        %898 = vmatpush1.msra.mxu0 0.0
        %899 = vmatprep.subr.mxu0 0.0
        %900 = vmatpush1.msra.mxu0 0.0
        %901 = vmatprep.subr.mxu0 0.0
        %902 = vmatpush1.msra.mxu0 0.0
        %903 = vmatprep.subr.mxu0 0.0
        %904 = vmatpush1.msra.mxu0 0.0
        %905 = vmatprep.subr.mxu0 0.0
        %906 = vmatpush1.msra.mxu0 0.0
        %907 = vmatprep.subr.mxu0 0.0
        %908 = vmatpush1.msra.mxu0 0.0
        %909 = vmatprep.subr.mxu0 0.0
        %910 = vmatpush1.msra.mxu0 0.0
        %911 = vmatprep.subr.mxu0 0.0
        %912 = vmatpush1.msra.mxu0 0.0
        %913 = vmatprep.subr.mxu0 0.0
        %914 = vmatpush1.msra.mxu0 0.0
        %915 = vmatprep.subr.mxu0 0.0
        %916 = vmatpush1.msra.mxu0 0.0
        %917 = vmatprep.subr.mxu0 0.0
        %918 = vmatpush1.msra.mxu0 0.0
        %919 = vmatprep.subr.mxu0 0.0
        %920 = vmatpush1.msra.mxu0 0.0
        %921 = vmatprep.subr.mxu0 0.0
        %922 = vmatpush1.msra.mxu0 0.0
        %923 = vmatprep.subr.mxu0 0.0
        %924 = vmatpush1.msra.mxu0 0.0
        %925 = vmatprep.subr.mxu0 0.0
        %926 = vmatpush1.msra.mxu0 0.0
        %927 = vmatprep.subr.mxu0 0.0
        %928 = vmatpush1.msra.mxu0 0.0
        %929 = vmatprep.subr.mxu0 0.0
        %930 = vmatpush1.msra.mxu0 0.0
        %931 = vmatprep.subr.mxu0 0.0
        %932 = vmatpush1.msra.mxu0 0.0
        %933 = vmatprep.subr.mxu0 0.0
        %934 = vmatpush1.msra.mxu0 0.0
        %935 = vmatprep.mubr.f32.mxu0 0.0
        %936 = vmatmul.mubr.f32.gmra.mrb[0].mxu0 %v865
        %v937 = vpop.f32.mrb[0].mxu0
        %v938 = vadd.f32 %v861, %v937
        %v939 = vpop.f32.mrb[0].mxu0
        %v940 = vadd.f32 %v861, %v939
        %941 = vdwg.mxu0
        %v942 = vmax.f32 %v938, 0.0
        %v943 = vmax.f32 %v940, 0.0
        %v944 = vld [vmem:[%s5] sm:$0xff]
        %v945 = vld [vmem:[%s5 + $0x8] sm:$0xff]
        %v946 = vld [vmem:[%s6] sm:$0xff]
        %v947 = vld [vmem:[%s6 + $0x8] sm:$0xff]
        %949 = vset.pattern.permute.xlu0 0
        %950 = vperm.xlu0 %949, %v946
        %v951 = vpop.permute.xlu0 %950
        %954 = vset.pattern.permute.xlu0 0
        %955 = vperm.xlu0 %954, %v947
        %v956 = vpop.permute.xlu0 %955
        %vm958 = vcmask 31744
        %v960 = vsel %vm958, %v944, 0
        %v963 = vsel %vm958, %v945, 0
        %v966 = vsel %vm767, %v942, 0
        %v969 = vsel %vm767, %v943, 0
        %971 = vmatprep.subr.mxu0 %v969
        %972 = vmatpush1.msra.mxu0 %v966
        %973 = vmatprep.subr.mxu0 0.0
        %974 = vmatpush1.msra.mxu0 0.0
        %975 = vmatprep.subr.mxu0 0.0
        %976 = vmatpush1.msra.mxu0 0.0
        %977 = vmatprep.subr.mxu0 0.0
        %978 = vmatpush1.msra.mxu0 0.0
        %979 = vmatprep.subr.mxu0 0.0
        %980 = vmatpush1.msra.mxu0 0.0
        %981 = vmatprep.subr.mxu0 0.0
        %982 = vmatpush1.msra.mxu0 0.0
        %983 = vmatprep.subr.mxu0 0.0
        %984 = vmatpush1.msra.mxu0 0.0
        %985 = vmatprep.subr.mxu0 0.0
        %986 = vmatpush1.msra.mxu0 0.0
        %987 = vmatprep.subr.mxu0 0.0
        %988 = vmatpush1.msra.mxu0 0.0
        %989 = vmatprep.subr.mxu0 0.0
        %990 = vmatpush1.msra.mxu0 0.0
        %991 = vmatprep.subr.mxu0 0.0
        %992 = vmatpush1.msra.mxu0 0.0
        %993 = vmatprep.subr.mxu0 0.0
        %994 = vmatpush1.msra.mxu0 0.0
        %995 = vmatprep.subr.mxu0 0.0
        %996 = vmatpush1.msra.mxu0 0.0
        %997 = vmatprep.subr.mxu0 0.0
        %998 = vmatpush1.msra.mxu0 0.0
        %999 = vmatprep.subr.mxu0 0.0
        %1000 = vmatpush1.msra.mxu0 0.0
        %1001 = vmatprep.subr.mxu0 0.0
        %1002 = vmatpush1.msra.mxu0 0.0
        %1003 = vmatprep.subr.mxu0 0.0
        %1004 = vmatpush1.msra.mxu0 0.0
        %1005 = vmatprep.subr.mxu0 0.0
        %1006 = vmatpush1.msra.mxu0 0.0
        %1007 = vmatprep.subr.mxu0 0.0
        %1008 = vmatpush1.msra.mxu0 0.0
        %1009 = vmatprep.subr.mxu0 0.0
        %1010 = vmatpush1.msra.mxu0 0.0
        %1011 = vmatprep.subr.mxu0 0.0
        %1012 = vmatpush1.msra.mxu0 0.0
        %1013 = vmatprep.subr.mxu0 0.0
        %1014 = vmatpush1.msra.mxu0 0.0
        %1015 = vmatprep.subr.mxu0 0.0
        %1016 = vmatpush1.msra.mxu0 0.0
        %1017 = vmatprep.subr.mxu0 0.0
        %1018 = vmatpush1.msra.mxu0 0.0
        %1019 = vmatprep.subr.mxu0 0.0
        %1020 = vmatpush1.msra.mxu0 0.0
        %1021 = vmatprep.subr.mxu0 0.0
        %1022 = vmatpush1.msra.mxu0 0.0
        %1023 = vmatprep.subr.mxu0 0.0
        %1024 = vmatpush1.msra.mxu0 0.0
        %1025 = vmatprep.subr.mxu0 0.0
        %1026 = vmatpush1.msra.mxu0 0.0
        %1027 = vmatprep.subr.mxu0 0.0
        %1028 = vmatpush1.msra.mxu0 0.0
        %1029 = vmatprep.subr.mxu0 0.0
        %1030 = vmatpush1.msra.mxu0 0.0
        %1031 = vmatprep.subr.mxu0 0.0
        %1032 = vmatpush1.msra.mxu0 0.0
        %1033 = vmatprep.subr.mxu0 0.0
        %1034 = vmatpush1.msra.mxu0 0.0
        %1035 = vmatprep.mubr.f32.mxu0 0.0
        %1036 = vmatmul.mubr.f32.gmra.mrb[0].mxu0 %v960
        %v1037 = vpop.f32.mrb[0].mxu0
        %v1038 = vadd.f32 %v951, %v1037
        %v1039 = vpop.f32.mrb[0].mxu0
        %v1040 = vadd.f32 %v951, %v1039
        %1041 = vmatprep.mubr.f32.mxu0 0.0
        %1042 = vmatmul.mubr.f32.gmra.mrb[0].mxu0 %v963
        %v1043 = vpop.f32.mrb[0].mxu0
        %v1044 = vadd.f32 %v956, %v1043
        %v1045 = vpop.f32.mrb[0].mxu0
        %v1046 = vadd.f32 %v956, %v1045
        %1047 = vdwg.mxu0
        %v1048 = vld [vmem:[%s13] sm:$0xff]
        %v1049 = vld [vmem:[%s13 + $0x8] sm:$0xff]
        %v1050 = vld [vmem:[%s13 + $0x10] sm:$0xff]
        %v1051 = vld [vmem:[%s13 + $0x18] sm:$0xff]
        %v1052 = vld [vmem:[%s13 + $0x20] sm:$0xff]
        %v1053 = vld [vmem:[%s13 + $0x28] sm:$0xff]
        %v1054 = vld [vmem:[%s13 + $0x30] sm:$0xff]
        %v1055 = vld [vmem:[%s13 + $0x38] sm:$0xff]
        %v1056 = vld [vmem:[%s13 + $0x40] sm:$0xff]
        %v1057 = vld [vmem:[%s13 + $0x48] sm:$0xff]
        %v1058 = vld [vmem:[%s13 + $0x50] sm:$0xff]
        %v1059 = vld [vmem:[%s13 + $0x58] sm:$0xff]
        %v1060 = vld [vmem:[%s13 + $0x60] sm:$0xff]
        %v1061 = vld [vmem:[%s13 + $0x68] sm:$0xff]
        %v1062 = vld [vmem:[%s13 + $0x70] sm:$0xff]
        %v1063 = vld [vmem:[%s13 + $0x78] sm:$0xff]
        %v1064 = vld [vmem:[%s13 + $0x80] sm:$0xff]
        %v1065 = vld [vmem:[%s13 + $0x88] sm:$0xff]
        %v1066 = vld [vmem:[%s13 + $0x90] sm:$0xff]
        %v1067 = vld [vmem:[%s13 + $0x98] sm:$0xff]
        %v1068 = vld [vmem:[%s13 + $0xa0] sm:$0xff]
        %v1069 = vld [vmem:[%s13 + $0xa8] sm:$0xff]
        %v1070 = vld [vmem:[%s13 + $0xb0] sm:$0xff]
        %v1071 = vld [vmem:[%s13 + $0xb8] sm:$0xff]
        %v1072 = vld [vmem:[%s13 + $0xc0] sm:$0xff]
        %v1073 = vld [vmem:[%s13 + $0xc8] sm:$0xff]
        %v1074 = vld [vmem:[%s13 + $0xd0] sm:$0xff]
        %v1075 = vld [vmem:[%s13 + $0xd8] sm:$0xff]
        %v1076 = vld [vmem:[%s13 + $0xe0] sm:$0xff]
        %v1077 = vld [vmem:[%s13 + $0xe8] sm:$0xff]
        %v1078 = vld [vmem:[%s13 + $0xf0] sm:$0xff]
        %v1079 = vld [vmem:[%s13 + $0xf8] sm:$0xff]
        %1080 = vmatprep.subr.mxu0 0.0
        %1081 = vmatpush1.msra.mxu0 %v1048
        %1082 = vmatprep.subr.mxu0 0.0
        %1083 = vmatpush1.msra.mxu0 %v1049
        %1084 = vmatprep.subr.mxu0 0.0
        %1085 = vmatpush1.msra.mxu0 %v1050
        %1086 = vmatprep.subr.mxu0 0.0
        %1087 = vmatpush1.msra.mxu0 %v1051
        %1088 = vmatprep.subr.mxu0 0.0
        %1089 = vmatpush1.msra.mxu0 %v1052
        %1090 = vmatprep.subr.mxu0 0.0
        %1091 = vmatpush1.msra.mxu0 %v1053
        %1092 = vmatprep.subr.mxu0 0.0
        %1093 = vmatpush1.msra.mxu0 %v1054
        %1094 = vmatprep.subr.mxu0 0.0
        %1095 = vmatpush1.msra.mxu0 %v1055
        %1096 = vmatprep.subr.mxu0 0.0
        %1097 = vmatpush1.msra.mxu0 %v1056
        %1098 = vmatprep.subr.mxu0 0.0
        %1099 = vmatpush1.msra.mxu0 %v1057
        %1100 = vmatprep.subr.mxu0 0.0
        %1101 = vmatpush1.msra.mxu0 %v1058
        %1102 = vmatprep.subr.mxu0 0.0
        %1103 = vmatpush1.msra.mxu0 %v1059
        %1104 = vmatprep.subr.mxu0 0.0
        %1105 = vmatpush1.msra.mxu0 %v1060
        %1106 = vmatprep.subr.mxu0 0.0
        %1107 = vmatpush1.msra.mxu0 %v1061
        %1108 = vmatprep.subr.mxu0 0.0
        %1109 = vmatpush1.msra.mxu0 %v1062
        %1110 = vmatprep.subr.mxu0 0.0
        %1111 = vmatpush1.msra.mxu0 %v1063
        %1112 = vmatprep.subr.mxu0 0.0
        %1113 = vmatpush1.msra.mxu0 %v1064
        %1114 = vmatprep.subr.mxu0 0.0
        %1115 = vmatpush1.msra.mxu0 %v1065
        %1116 = vmatprep.subr.mxu0 0.0
        %1117 = vmatpush1.msra.mxu0 %v1066
        %1118 = vmatprep.subr.mxu0 0.0
        %1119 = vmatpush1.msra.mxu0 %v1067
        %1120 = vmatprep.subr.mxu0 0.0
        %1121 = vmatpush1.msra.mxu0 %v1068
        %1122 = vmatprep.subr.mxu0 0.0
        %1123 = vmatpush1.msra.mxu0 %v1069
        %1124 = vmatprep.subr.mxu0 0.0
        %1125 = vmatpush1.msra.mxu0 %v1070
        %1126 = vmatprep.subr.mxu0 0.0
        %1127 = vmatpush1.msra.mxu0 %v1071
        %1128 = vmatprep.subr.mxu0 0.0
        %1129 = vmatpush1.msra.mxu0 %v1072
        %1130 = vmatprep.subr.mxu0 0.0
        %1131 = vmatpush1.msra.mxu0 %v1073
        %1132 = vmatprep.subr.mxu0 0.0
        %1133 = vmatpush1.msra.mxu0 %v1074
        %1134 = vmatprep.subr.mxu0 0.0
        %1135 = vmatpush1.msra.mxu0 %v1075
        %1136 = vmatprep.subr.mxu0 0.0
        %1137 = vmatpush1.msra.mxu0 %v1076
        %1138 = vmatprep.subr.mxu0 0.0
        %1139 = vmatpush1.msra.mxu0 %v1077
        %1140 = vmatprep.subr.mxu0 0.0
        %1141 = vmatpush1.msra.mxu0 %v1078
        %1142 = vmatprep.subr.mxu0 0.0
        %1143 = vmatpush1.msra.mxu0 %v1079
        %1144 = vmatprep.mubr.f32.mxu0 %v1040
        %1145 = vmatmul.mubr.f32.gmra.mrb[0].mxu0 %v1038
        %v1146 = vpop.f32.mrb[0].mxu0
        %v1147 = vadd.f32 0.0, %v1146
        %v1148 = vpop.f32.mrb[0].mxu0
        %1149 = vmatprep.mubr.f32.mxu0 %v1046
        %1150 = vmatmul.mubr.f32.gmra.mrb[0].mxu0 %v1044
        %v1151 = vpop.f32.mrb[0].mxu0
        %v1152 = vadd.f32 0.0, %v1151
        %v1153 = vpop.f32.mrb[0].mxu0
        %1154 = vdwg.mxu0
        %v1155 = vld [vmem:[%s14] sm:$0xff]
        %v1156 = vld [vmem:[%s14 + $0x8] sm:$0xff]
        %v1157 = vld [vmem:[%s14 + $0x10] sm:$0xff]
        %v1158 = vld [vmem:[%s14 + $0x18] sm:$0xff]
        %v1159 = vld [vmem:[%s14 + $0x20] sm:$0xff]
        %v1160 = vld [vmem:[%s14 + $0x28] sm:$0xff]
        %v1161 = vld [vmem:[%s14 + $0x30] sm:$0xff]
        %v1162 = vld [vmem:[%s14 + $0x38] sm:$0xff]
        %v1163 = vld [vmem:[%s14 + $0x40] sm:$0xff]
        %v1164 = vld [vmem:[%s14 + $0x48] sm:$0xff]
        %v1165 = vld [vmem:[%s14 + $0x50] sm:$0xff]
        %v1166 = vld [vmem:[%s14 + $0x58] sm:$0xff]
        %v1167 = vld [vmem:[%s14 + $0x60] sm:$0xff]
        %v1168 = vld [vmem:[%s14 + $0x68] sm:$0xff]
        %v1169 = vld [vmem:[%s14 + $0x70] sm:$0xff]
        %v1170 = vld [vmem:[%s14 + $0x78] sm:$0xff]
        %v1171 = vld [vmem:[%s14 + $0x80] sm:$0xff]
        %v1172 = vld [vmem:[%s14 + $0x88] sm:$0xff]
        %v1173 = vld [vmem:[%s14 + $0x90] sm:$0xff]
        %v1174 = vld [vmem:[%s14 + $0x98] sm:$0xff]
        %v1175 = vld [vmem:[%s14 + $0xa0] sm:$0xff]
        %v1176 = vld [vmem:[%s14 + $0xa8] sm:$0xff]
        %v1177 = vld [vmem:[%s14 + $0xb0] sm:$0xff]
        %v1178 = vld [vmem:[%s14 + $0xb8] sm:$0xff]
        %v1179 = vld [vmem:[%s14 + $0xc0] sm:$0xff]
        %v1180 = vld [vmem:[%s14 + $0xc8] sm:$0xff]
        %v1181 = vld [vmem:[%s14 + $0xd0] sm:$0xff]
        %v1182 = vld [vmem:[%s14 + $0xd8] sm:$0xff]
        %v1183 = vld [vmem:[%s14 + $0xe0] sm:$0xff]
        %v1184 = vld [vmem:[%s14 + $0xe8] sm:$0xff]
        %v1185 = vld [vmem:[%s14 + $0xf0] sm:$0xff]
        %v1186 = vld [vmem:[%s14 + $0xf8] sm:$0xff]
        %1187 = vmatprep.subr.mxu0 0.0
        %1188 = vmatpush1.msra.mxu0 %v1155
        %1189 = vmatprep.subr.mxu0 0.0
        %1190 = vmatpush1.msra.mxu0 %v1156
        %1191 = vmatprep.subr.mxu0 0.0
        %1192 = vmatpush1.msra.mxu0 %v1157
        %1193 = vmatprep.subr.mxu0 0.0
        %1194 = vmatpush1.msra.mxu0 %v1158
        %1195 = vmatprep.subr.mxu0 0.0
        %1196 = vmatpush1.msra.mxu0 %v1159
        %1197 = vmatprep.subr.mxu0 0.0
        %1198 = vmatpush1.msra.mxu0 %v1160
        %1199 = vmatprep.subr.mxu0 0.0
        %1200 = vmatpush1.msra.mxu0 %v1161
        %1201 = vmatprep.subr.mxu0 0.0
        %1202 = vmatpush1.msra.mxu0 %v1162
        %1203 = vmatprep.subr.mxu0 0.0
        %1204 = vmatpush1.msra.mxu0 %v1163
        %1205 = vmatprep.subr.mxu0 0.0
        %1206 = vmatpush1.msra.mxu0 %v1164
        %1207 = vmatprep.subr.mxu0 0.0
        %1208 = vmatpush1.msra.mxu0 %v1165
        %1209 = vmatprep.subr.mxu0 0.0
        %1210 = vmatpush1.msra.mxu0 %v1166
        %1211 = vmatprep.subr.mxu0 0.0
        %1212 = vmatpush1.msra.mxu0 %v1167
        %1213 = vmatprep.subr.mxu0 0.0
        %1214 = vmatpush1.msra.mxu0 %v1168
        %1215 = vmatprep.subr.mxu0 0.0
        %1216 = vmatpush1.msra.mxu0 %v1169
        %1217 = vmatprep.subr.mxu0 0.0
        %1218 = vmatpush1.msra.mxu0 %v1170
        %1219 = vmatprep.subr.mxu0 0.0
        %1220 = vmatpush1.msra.mxu0 %v1171
        %1221 = vmatprep.subr.mxu0 0.0
        %1222 = vmatpush1.msra.mxu0 %v1172
        %1223 = vmatprep.subr.mxu0 0.0
        %1224 = vmatpush1.msra.mxu0 %v1173
        %1225 = vmatprep.subr.mxu0 0.0
        %1226 = vmatpush1.msra.mxu0 %v1174
        %1227 = vmatprep.subr.mxu0 0.0
        %1228 = vmatpush1.msra.mxu0 %v1175
        %1229 = vmatprep.subr.mxu0 0.0
        %1230 = vmatpush1.msra.mxu0 %v1176
        %1231 = vmatprep.subr.mxu0 0.0
        %1232 = vmatpush1.msra.mxu0 %v1177
        %1233 = vmatprep.subr.mxu0 0.0
        %1234 = vmatpush1.msra.mxu0 %v1178
        %1235 = vmatprep.subr.mxu0 0.0
        %1236 = vmatpush1.msra.mxu0 %v1179
        %1237 = vmatprep.subr.mxu0 0.0
        %1238 = vmatpush1.msra.mxu0 %v1180
        %1239 = vmatprep.subr.mxu0 0.0
        %1240 = vmatpush1.msra.mxu0 %v1181
        %1241 = vmatprep.subr.mxu0 0.0
        %1242 = vmatpush1.msra.mxu0 %v1182
        %1243 = vmatprep.subr.mxu0 0.0
        %1244 = vmatpush1.msra.mxu0 %v1183
        %1245 = vmatprep.subr.mxu0 0.0
        %1246 = vmatpush1.msra.mxu0 %v1184
        %1247 = vmatprep.subr.mxu0 0.0
        %1248 = vmatpush1.msra.mxu0 %v1185
        %1249 = vmatprep.subr.mxu0 0.0
        %1250 = vmatpush1.msra.mxu0 %v1186
        %1251 = vmatprep.mubr.f32.mxu0 %v1040
        %1252 = vmatmul.mubr.f32.gmra.mrb[0].mxu0 %v1038
        %v1253 = vpop.f32.mrb[0].mxu0
        %v1254 = vadd.f32 0.0, %v1253
        %v1255 = vpop.f32.mrb[0].mxu0
        %1256 = vmatprep.mubr.f32.mxu0 %v1046
        %1257 = vmatmul.mubr.f32.gmra.mrb[0].mxu0 %v1044
        %v1258 = vpop.f32.mrb[0].mxu0
        %v1259 = vadd.f32 0.0, %v1258
        %v1260 = vpop.f32.mrb[0].mxu0
        %1261 = vdwg.mxu0
        %1264 = vrot.lane.b32.xlu0 %v1254, 16
        %v1265 = vpop.permute.xlu0 %1264
        %1266 = vrot.lane.b32.xlu0 %v1259, 16
        %v1267 = vpop.permute.xlu0 %1266
        %v1270 = vsel %vm612, %v1147, %v1265
        %v1271 = vsel %vm612, %v1152, %v1267
        %v1272 = vld [vmem:[%s7] sm:$0xff]
        %v1273 = vld [vmem:[%s8] sm:$0xff]
        %1275 = vset.pattern.permute.xlu0 0
        %1276 = vperm.xlu0 %1275, %v1273
        %v1277 = vpop.permute.xlu0 %1276
        %v1280 = vsel %vm612, %v1272, 0
        %1282 = vmatprep.subr.mxu0 0.0
        %1283 = vmatpush1.msra.mxu0 %v1270
        %1284 = vmatprep.subr.mxu0 0.0
        %1285 = vmatpush1.msra.mxu0 %v1271
        %1286 = vmatprep.subr.mxu0 0.0
        %1287 = vmatpush1.msra.mxu0 0.0
        %1288 = vmatprep.subr.mxu0 0.0
        %1289 = vmatpush1.msra.mxu0 0.0
        %1290 = vmatprep.subr.mxu0 0.0
        %1291 = vmatpush1.msra.mxu0 0.0
        %1292 = vmatprep.subr.mxu0 0.0
        %1293 = vmatpush1.msra.mxu0 0.0
        %1294 = vmatprep.subr.mxu0 0.0
        %1295 = vmatpush1.msra.mxu0 0.0
        %1296 = vmatprep.subr.mxu0 0.0
        %1297 = vmatpush1.msra.mxu0 0.0
        %1298 = vmatprep.subr.mxu0 0.0
        %1299 = vmatpush1.msra.mxu0 0.0
        %1300 = vmatprep.subr.mxu0 0.0
        %1301 = vmatpush1.msra.mxu0 0.0
        %1302 = vmatprep.subr.mxu0 0.0
        %1303 = vmatpush1.msra.mxu0 0.0
        %1304 = vmatprep.subr.mxu0 0.0
        %1305 = vmatpush1.msra.mxu0 0.0
        %1306 = vmatprep.subr.mxu0 0.0
        %1307 = vmatpush1.msra.mxu0 0.0
        %1308 = vmatprep.subr.mxu0 0.0
        %1309 = vmatpush1.msra.mxu0 0.0
        %1310 = vmatprep.subr.mxu0 0.0
        %1311 = vmatpush1.msra.mxu0 0.0
        %1312 = vmatprep.subr.mxu0 0.0
        %1313 = vmatpush1.msra.mxu0 0.0
        %1314 = vmatprep.subr.mxu0 0.0
        %1315 = vmatpush1.msra.mxu0 0.0
        %1316 = vmatprep.subr.mxu0 0.0
        %1317 = vmatpush1.msra.mxu0 0.0
        %1318 = vmatprep.subr.mxu0 0.0
        %1319 = vmatpush1.msra.mxu0 0.0
        %1320 = vmatprep.subr.mxu0 0.0
        %1321 = vmatpush1.msra.mxu0 0.0
        %1322 = vmatprep.subr.mxu0 0.0
        %1323 = vmatpush1.msra.mxu0 0.0
        %1324 = vmatprep.subr.mxu0 0.0
        %1325 = vmatpush1.msra.mxu0 0.0
        %1326 = vmatprep.subr.mxu0 0.0
        %1327 = vmatpush1.msra.mxu0 0.0
        %1328 = vmatprep.subr.mxu0 0.0
        %1329 = vmatpush1.msra.mxu0 0.0
        %1330 = vmatprep.subr.mxu0 0.0
        %1331 = vmatpush1.msra.mxu0 0.0
        %1332 = vmatprep.subr.mxu0 0.0
        %1333 = vmatpush1.msra.mxu0 0.0
        %1334 = vmatprep.subr.mxu0 0.0
        %1335 = vmatpush1.msra.mxu0 0.0
        %1336 = vmatprep.subr.mxu0 0.0
        %1337 = vmatpush1.msra.mxu0 0.0
        %1338 = vmatprep.subr.mxu0 0.0
        %1339 = vmatpush1.msra.mxu0 0.0
        %1340 = vmatprep.subr.mxu0 0.0
        %1341 = vmatpush1.msra.mxu0 0.0
        %1342 = vmatprep.subr.mxu0 0.0
        %1343 = vmatpush1.msra.mxu0 0.0
        %1344 = vmatprep.subr.mxu0 0.0
        %1345 = vmatpush1.msra.mxu0 0.0
        %1346 = vmatprep.mubr.f32.mxu0 0.0
        %1347 = vmatmul.mubr.f32.gmra.mrb[0].mxu0 %v1280
        %v1348 = vpop.f32.mrb[0].mxu0
        %v1349 = vadd.f32 %v1277, %v1348
        %v1350 = vpop.f32.mrb[0].mxu0
        %1351 = vdwg.mxu0
        %v1352 = vadd.f32 %v1349, 3.0
        %v1353 = vmax.f32 %v1352, 0.0
        %v1354 = vmin.f32 %v1353, 6.0
        %v1355 = vmul.f32 %v1349, %v1354
        %v1356 = vmul.f32 %v1355, 0.16666667
        %v1357 = vld [vmem:[%s9] sm:$0xff]
        %v1358 = vld [vmem:[%s9 + $0x8] sm:$0xff]
        %v1359 = vld [vmem:[%s10] sm:$0xff]
        %v1360 = vld [vmem:[%s10 + $0x8] sm:$0xff]
        %1362 = vset.pattern.permute.xlu0 0
        %1363 = vperm.xlu0 %1362, %v1359
        %v1364 = vpop.permute.xlu0 %1363
        %1367 = vset.pattern.permute.xlu0 0
        %1368 = vperm.xlu0 %1367, %v1360
        %v1369 = vpop.permute.xlu0 %1368
        %vm1371 = vcmask 64512
        %v1373 = vsel %vm1371, %v1357, 0
        %v1376 = vsel %vm1371, %v1358, 0
        %1378 = vmatprep.subr.mxu0 0.0
        %1379 = vmatpush1.msra.mxu0 %v1356
        %1380 = vmatprep.subr.mxu0 0.0
        %1381 = vmatpush1.msra.mxu0 0.0
        %1382 = vmatprep.subr.mxu0 0.0
        %1383 = vmatpush1.msra.mxu0 0.0
        %1384 = vmatprep.subr.mxu0 0.0
        %1385 = vmatpush1.msra.mxu0 0.0
        %1386 = vmatprep.subr.mxu0 0.0
        %1387 = vmatpush1.msra.mxu0 0.0
        %1388 = vmatprep.subr.mxu0 0.0
        %1389 = vmatpush1.msra.mxu0 0.0
        %1390 = vmatprep.subr.mxu0 0.0
        %1391 = vmatpush1.msra.mxu0 0.0
        %1392 = vmatprep.subr.mxu0 0.0
        %1393 = vmatpush1.msra.mxu0 0.0
        %1394 = vmatprep.subr.mxu0 0.0
        %1395 = vmatpush1.msra.mxu0 0.0
        %1396 = vmatprep.subr.mxu0 0.0
        %1397 = vmatpush1.msra.mxu0 0.0
        %1398 = vmatprep.subr.mxu0 0.0
        %1399 = vmatpush1.msra.mxu0 0.0
        %1400 = vmatprep.subr.mxu0 0.0
        %1401 = vmatpush1.msra.mxu0 0.0
        %1402 = vmatprep.subr.mxu0 0.0
        %1403 = vmatpush1.msra.mxu0 0.0
        %1404 = vmatprep.subr.mxu0 0.0
        %1405 = vmatpush1.msra.mxu0 0.0
        %1406 = vmatprep.subr.mxu0 0.0
        %1407 = vmatpush1.msra.mxu0 0.0
        %1408 = vmatprep.subr.mxu0 0.0
        %1409 = vmatpush1.msra.mxu0 0.0
        %1410 = vmatprep.subr.mxu0 0.0
        %1411 = vmatpush1.msra.mxu0 0.0
        %1412 = vmatprep.subr.mxu0 0.0
        %1413 = vmatpush1.msra.mxu0 0.0
        %1414 = vmatprep.subr.mxu0 0.0
        %1415 = vmatpush1.msra.mxu0 0.0
        %1416 = vmatprep.subr.mxu0 0.0
        %1417 = vmatpush1.msra.mxu0 0.0
        %1418 = vmatprep.subr.mxu0 0.0
        %1419 = vmatpush1.msra.mxu0 0.0
        %1420 = vmatprep.subr.mxu0 0.0
        %1421 = vmatpush1.msra.mxu0 0.0
        %1422 = vmatprep.subr.mxu0 0.0
        %1423 = vmatpush1.msra.mxu0 0.0
        %1424 = vmatprep.subr.mxu0 0.0
        %1425 = vmatpush1.msra.mxu0 0.0
        %1426 = vmatprep.subr.mxu0 0.0
        %1427 = vmatpush1.msra.mxu0 0.0
        %1428 = vmatprep.subr.mxu0 0.0
        %1429 = vmatpush1.msra.mxu0 0.0
        %1430 = vmatprep.subr.mxu0 0.0
        %1431 = vmatpush1.msra.mxu0 0.0
        %1432 = vmatprep.subr.mxu0 0.0
        %1433 = vmatpush1.msra.mxu0 0.0
        %1434 = vmatprep.subr.mxu0 0.0
        %1435 = vmatpush1.msra.mxu0 0.0
        %1436 = vmatprep.subr.mxu0 0.0
        %1437 = vmatpush1.msra.mxu0 0.0
        %1438 = vmatprep.subr.mxu0 0.0
        %1439 = vmatpush1.msra.mxu0 0.0
        %1440 = vmatprep.subr.mxu0 0.0
        %1441 = vmatpush1.msra.mxu0 0.0
        %1442 = vmatprep.mubr.f32.mxu0 0.0
        %1443 = vmatmul.mubr.f32.gmra.mrb[0].mxu0 %v1373
        %v1444 = vpop.f32.mrb[0].mxu0
        %v1445 = vadd.f32 %v1364, %v1444
        %v1446 = vpop.f32.mrb[0].mxu0
        %1447 = vmatprep.mubr.f32.mxu0 0.0
        %1448 = vmatmul.mubr.f32.gmra.mrb[0].mxu0 %v1376
        %v1449 = vpop.f32.mrb[0].mxu0
        %v1450 = vadd.f32 %v1369, %v1449
        %v1451 = vpop.f32.mrb[0].mxu0
        %1452 = vdwg.mxu0
        %v1453 = vxor.u32 %v1445, 2147483648
        %v1454 = vxor.u32 %v1450, 2147483648
        %v1455 = vmul.f32 %v1453, 1.442695
        %v1456 = vpow.pop %v1455
        %v1457 = vmul.f32 %v1454, 1.442695
        %v1458 = vpow.pop %v1457
        %v1459 = vadd.f32 %v1456, 1.0
        %v1460 = vadd.f32 %v1458, 1.0
        %v1461 = vrcp.pop %v1459
        %v1462 = vmul.f32 1.0, %v1461
        %v1463 = vrcp.pop %v1460
        %v1464 = vmul.f32 1.0, %v1463
        %v1465 = vld [vmem:[%s11] sm:$0xff]
        %v1466 = vld [vmem:[%s11 + $0x8] sm:$0xff]
        %v1467 = vld [vmem:[%s12] sm:$0xff]
        %v1468 = vld [vmem:[%s12 + $0x8] sm:$0xff]
        %1470 = vset.pattern.permute.xlu0 0
        %1471 = vperm.xlu0 %1470, %v1467
        %v1472 = vpop.permute.xlu0 %1471
        %1475 = vset.pattern.permute.xlu0 0
        %1476 = vperm.xlu0 %1475, %v1468
        %v1477 = vpop.permute.xlu0 %1476
        %1480 = vrot.lane.b32.xlu0 %v1356, 112
        %v1481 = vpop.permute.xlu0 %1480
        %v1484 = vsel %vm1371, %v1465, 0
        %v1487 = vsel %vm1371, %v1466, 0
        %1489 = vmatprep.subr.mxu0 0.0
        %1490 = vmatpush1.msra.mxu0 %v1481
        %1491 = vmatprep.subr.mxu0 0.0
        %1492 = vmatpush1.msra.mxu0 0.0
        %1493 = vmatprep.subr.mxu0 0.0
        %1494 = vmatpush1.msra.mxu0 0.0
        %1495 = vmatprep.subr.mxu0 0.0
        %1496 = vmatpush1.msra.mxu0 0.0
        %1497 = vmatprep.subr.mxu0 0.0
        %1498 = vmatpush1.msra.mxu0 0.0
        %1499 = vmatprep.subr.mxu0 0.0
        %1500 = vmatpush1.msra.mxu0 0.0
        %1501 = vmatprep.subr.mxu0 0.0
        %1502 = vmatpush1.msra.mxu0 0.0
        %1503 = vmatprep.subr.mxu0 0.0
        %1504 = vmatpush1.msra.mxu0 0.0
        %1505 = vmatprep.subr.mxu0 0.0
        %1506 = vmatpush1.msra.mxu0 0.0
        %1507 = vmatprep.subr.mxu0 0.0
        %1508 = vmatpush1.msra.mxu0 0.0
        %1509 = vmatprep.subr.mxu0 0.0
        %1510 = vmatpush1.msra.mxu0 0.0
        %1511 = vmatprep.subr.mxu0 0.0
        %1512 = vmatpush1.msra.mxu0 0.0
        %1513 = vmatprep.subr.mxu0 0.0
        %1514 = vmatpush1.msra.mxu0 0.0
        %1515 = vmatprep.subr.mxu0 0.0
        %1516 = vmatpush1.msra.mxu0 0.0
        %1517 = vmatprep.subr.mxu0 0.0
        %1518 = vmatpush1.msra.mxu0 0.0
        %1519 = vmatprep.subr.mxu0 0.0
        %1520 = vmatpush1.msra.mxu0 0.0
        %1521 = vmatprep.subr.mxu0 0.0
        %1522 = vmatpush1.msra.mxu0 0.0
        %1523 = vmatprep.subr.mxu0 0.0
        %1524 = vmatpush1.msra.mxu0 0.0
        %1525 = vmatprep.subr.mxu0 0.0
        %1526 = vmatpush1.msra.mxu0 0.0
        %1527 = vmatprep.subr.mxu0 0.0
        %1528 = vmatpush1.msra.mxu0 0.0
        %1529 = vmatprep.subr.mxu0 0.0
        %1530 = vmatpush1.msra.mxu0 0.0
        %1531 = vmatprep.subr.mxu0 0.0
        %1532 = vmatpush1.msra.mxu0 0.0
        %1533 = vmatprep.subr.mxu0 0.0
        %1534 = vmatpush1.msra.mxu0 0.0
        %1535 = vmatprep.subr.mxu0 0.0
        %1536 = vmatpush1.msra.mxu0 0.0
        %1537 = vmatprep.subr.mxu0 0.0
        %1538 = vmatpush1.msra.mxu0 0.0
        %1539 = vmatprep.subr.mxu0 0.0
        %1540 = vmatpush1.msra.mxu0 0.0
        %1541 = vmatprep.subr.mxu0 0.0
        %1542 = vmatpush1.msra.mxu0 0.0
        %1543 = vmatprep.subr.mxu0 0.0
        %1544 = vmatpush1.msra.mxu0 0.0
        %1545 = vmatprep.subr.mxu0 0.0
        %1546 = vmatpush1.msra.mxu0 0.0
        %1547 = vmatprep.subr.mxu0 0.0
        %1548 = vmatpush1.msra.mxu0 0.0
        %1549 = vmatprep.subr.mxu0 0.0
        %1550 = vmatpush1.msra.mxu0 0.0
        %1551 = vmatprep.subr.mxu0 0.0
        %1552 = vmatpush1.msra.mxu0 0.0
        %1553 = vmatprep.mubr.f32.mxu0 0.0
        %1554 = vmatmul.mubr.f32.gmra.mrb[0].mxu0 %v1484
        %v1555 = vpop.f32.mrb[0].mxu0
        %v1556 = vadd.f32 %v1472, %v1555
        %v1557 = vpop.f32.mrb[0].mxu0
        %1558 = vmatprep.mubr.f32.mxu0 0.0
        %1559 = vmatmul.mubr.f32.gmra.mrb[0].mxu0 %v1487
        %v1560 = vpop.f32.mrb[0].mxu0
        %v1561 = vadd.f32 %v1477, %v1560
        %v1562 = vpop.f32.mrb[0].mxu0
        %1563 = vdwg.mxu0
        %v1564 = vxor.u32 %v1556, 2147483648
        %v1565 = vxor.u32 %v1561, 2147483648
        %v1566 = vmul.f32 %v1564, 1.442695
        %v1567 = vpow.pop %v1566
        %v1568 = vmul.f32 %v1565, 1.442695
        %v1569 = vpow.pop %v1568
        %v1570 = vadd.f32 %v1567, 1.0
        %v1571 = vadd.f32 %v1569, 1.0
        %v1572 = vrcp.pop %v1570
        %v1573 = vmul.f32 1.0, %v1572
        %v1574 = vrcp.pop %v1571
        %v1575 = vmul.f32 1.0, %v1574
        %v1576 = vld [vmem:[%s15] sm:$0xff]
        %v1577 = vld [vmem:[%s15 + $0x8] sm:$0xff]
        %v1578 = vld [vmem:[%s15 + $0x10] sm:$0xff]
        %v1579 = vld [vmem:[%s15 + $0x18] sm:$0xff]
        %v1581 = vsel %vm612, %v1462, 0
        %v1584 = vsel %vm612, %v1464, 0
        %1586 = vmatprep.subr.mxu0 %v1577
        %1587 = vmatpush1.msra.mxu0 %v1576
        %1588 = vmatprep.subr.mxu0 %v1579
        %1589 = vmatpush1.msra.mxu0 %v1578
        %1590 = vmatprep.subr.mxu0 0.0
        %1591 = vmatpush1.msra.mxu0 0.0
        %1592 = vmatprep.subr.mxu0 0.0
        %1593 = vmatpush1.msra.mxu0 0.0
        %1594 = vmatprep.subr.mxu0 0.0
        %1595 = vmatpush1.msra.mxu0 0.0
        %1596 = vmatprep.subr.mxu0 0.0
        %1597 = vmatpush1.msra.mxu0 0.0
        %1598 = vmatprep.subr.mxu0 0.0
        %1599 = vmatpush1.msra.mxu0 0.0
        %1600 = vmatprep.subr.mxu0 0.0
        %1601 = vmatpush1.msra.mxu0 0.0
        %1602 = vmatprep.subr.mxu0 0.0
        %1603 = vmatpush1.msra.mxu0 0.0
        %1604 = vmatprep.subr.mxu0 0.0
        %1605 = vmatpush1.msra.mxu0 0.0
        %1606 = vmatprep.subr.mxu0 0.0
        %1607 = vmatpush1.msra.mxu0 0.0
        %1608 = vmatprep.subr.mxu0 0.0
        %1609 = vmatpush1.msra.mxu0 0.0
        %1610 = vmatprep.subr.mxu0 0.0
        %1611 = vmatpush1.msra.mxu0 0.0
        %1612 = vmatprep.subr.mxu0 0.0
        %1613 = vmatpush1.msra.mxu0 0.0
        %1614 = vmatprep.subr.mxu0 0.0
        %1615 = vmatpush1.msra.mxu0 0.0
        %1616 = vmatprep.subr.mxu0 0.0
        %1617 = vmatpush1.msra.mxu0 0.0
        %1618 = vmatprep.subr.mxu0 0.0
        %1619 = vmatpush1.msra.mxu0 0.0
        %1620 = vmatprep.subr.mxu0 0.0
        %1621 = vmatpush1.msra.mxu0 0.0
        %1622 = vmatprep.subr.mxu0 0.0
        %1623 = vmatpush1.msra.mxu0 0.0
        %1624 = vmatprep.subr.mxu0 0.0
        %1625 = vmatpush1.msra.mxu0 0.0
        %1626 = vmatprep.subr.mxu0 0.0
        %1627 = vmatpush1.msra.mxu0 0.0
        %1628 = vmatprep.subr.mxu0 0.0
        %1629 = vmatpush1.msra.mxu0 0.0
        %1630 = vmatprep.subr.mxu0 0.0
        %1631 = vmatpush1.msra.mxu0 0.0
        %1632 = vmatprep.subr.mxu0 0.0
        %1633 = vmatpush1.msra.mxu0 0.0
        %1634 = vmatprep.subr.mxu0 0.0
        %1635 = vmatpush1.msra.mxu0 0.0
        %1636 = vmatprep.subr.mxu0 0.0
        %1637 = vmatpush1.msra.mxu0 0.0
        %1638 = vmatprep.subr.mxu0 0.0
        %1639 = vmatpush1.msra.mxu0 0.0
        %1640 = vmatprep.subr.mxu0 0.0
        %1641 = vmatpush1.msra.mxu0 0.0
        %1642 = vmatprep.subr.mxu0 0.0
        %1643 = vmatpush1.msra.mxu0 0.0
        %1644 = vmatprep.subr.mxu0 0.0
        %1645 = vmatpush1.msra.mxu0 0.0
        %1646 = vmatprep.subr.mxu0 0.0
        %1647 = vmatpush1.msra.mxu0 0.0
        %1648 = vmatprep.subr.mxu0 0.0
        %1649 = vmatpush1.msra.mxu0 0.0
        %1650 = vmatprep.mubr.f32.mxu0 0.0
        %1651 = vmatmul.mubr.f32.gmra.mrb[0].mxu0 %v1581
        %v1652 = vpop.f32.mrb[0].mxu0
        %v1653 = vadd.f32 0.0, %v1652
        %v1654 = vpop.f32.mrb[0].mxu0
        %v1655 = vadd.f32 0.0, %v1654
        %1656 = vmatprep.mubr.f32.mxu0 0.0
        %1657 = vmatmul.mubr.f32.gmra.mrb[0].mxu0 %v1584
        %v1658 = vpop.f32.mrb[0].mxu0
        %v1659 = vadd.f32 0.0, %v1658
        %v1660 = vpop.f32.mrb[0].mxu0
        %v1661 = vadd.f32 0.0, %v1660
        %1662 = vdwg.mxu0
        %v1663 = vld [vmem:[%s16] sm:$0xff]
        %v1664 = vld [vmem:[%s16 + $0x8] sm:$0xff]
        %v1665 = vld [vmem:[%s16 + $0x10] sm:$0xff]
        %v1666 = vld [vmem:[%s16 + $0x18] sm:$0xff]
        %v1668 = vsel %vm612, %v1573, 0
        %v1671 = vsel %vm612, %v1575, 0
        %1673 = vmatprep.subr.mxu0 %v1664
        %1674 = vmatpush1.msra.mxu0 %v1663
        %1675 = vmatprep.subr.mxu0 %v1666
        %1676 = vmatpush1.msra.mxu0 %v1665
        %1677 = vmatprep.subr.mxu0 0.0
        %1678 = vmatpush1.msra.mxu0 0.0
        %1679 = vmatprep.subr.mxu0 0.0
        %1680 = vmatpush1.msra.mxu0 0.0
        %1681 = vmatprep.subr.mxu0 0.0
        %1682 = vmatpush1.msra.mxu0 0.0
        %1683 = vmatprep.subr.mxu0 0.0
        %1684 = vmatpush1.msra.mxu0 0.0
        %1685 = vmatprep.subr.mxu0 0.0
        %1686 = vmatpush1.msra.mxu0 0.0
        %1687 = vmatprep.subr.mxu0 0.0
        %1688 = vmatpush1.msra.mxu0 0.0
        %1689 = vmatprep.subr.mxu0 0.0
        %1690 = vmatpush1.msra.mxu0 0.0
        %1691 = vmatprep.subr.mxu0 0.0
        %1692 = vmatpush1.msra.mxu0 0.0
        %1693 = vmatprep.subr.mxu0 0.0
        %1694 = vmatpush1.msra.mxu0 0.0
        %1695 = vmatprep.subr.mxu0 0.0
        %1696 = vmatpush1.msra.mxu0 0.0
        %1697 = vmatprep.subr.mxu0 0.0
        %1698 = vmatpush1.msra.mxu0 0.0
        %1699 = vmatprep.subr.mxu0 0.0
        %1700 = vmatpush1.msra.mxu0 0.0
        %1701 = vmatprep.subr.mxu0 0.0
        %1702 = vmatpush1.msra.mxu0 0.0
        %1703 = vmatprep.subr.mxu0 0.0
        %1704 = vmatpush1.msra.mxu0 0.0
        %1705 = vmatprep.subr.mxu0 0.0
        %1706 = vmatpush1.msra.mxu0 0.0
        %1707 = vmatprep.subr.mxu0 0.0
        %1708 = vmatpush1.msra.mxu0 0.0
        %1709 = vmatprep.subr.mxu0 0.0
        %1710 = vmatpush1.msra.mxu0 0.0
        %1711 = vmatprep.subr.mxu0 0.0
        %1712 = vmatpush1.msra.mxu0 0.0
        %1713 = vmatprep.subr.mxu0 0.0
        %1714 = vmatpush1.msra.mxu0 0.0
        %1715 = vmatprep.subr.mxu0 0.0
        %1716 = vmatpush1.msra.mxu0 0.0
        %1717 = vmatprep.subr.mxu0 0.0
        %1718 = vmatpush1.msra.mxu0 0.0
        %1719 = vmatprep.subr.mxu0 0.0
        %1720 = vmatpush1.msra.mxu0 0.0
        %1721 = vmatprep.subr.mxu0 0.0
        %1722 = vmatpush1.msra.mxu0 0.0
        %1723 = vmatprep.subr.mxu0 0.0
        %1724 = vmatpush1.msra.mxu0 0.0
        %1725 = vmatprep.subr.mxu0 0.0
        %1726 = vmatpush1.msra.mxu0 0.0
        %1727 = vmatprep.subr.mxu0 0.0
        %1728 = vmatpush1.msra.mxu0 0.0
        %1729 = vmatprep.subr.mxu0 0.0
        %1730 = vmatpush1.msra.mxu0 0.0
        %1731 = vmatprep.subr.mxu0 0.0
        %1732 = vmatpush1.msra.mxu0 0.0
        %1733 = vmatprep.subr.mxu0 0.0
        %1734 = vmatpush1.msra.mxu0 0.0
        %1735 = vmatprep.subr.mxu0 0.0
        %1736 = vmatpush1.msra.mxu0 0.0
        %1737 = vmatprep.mubr.f32.mxu0 0.0
        %1738 = vmatmul.mubr.f32.gmra.mrb[0].mxu0 %v1668
        %v1739 = vpop.f32.mrb[0].mxu0
        %v1740 = vadd.f32 0.0, %v1739
        %v1741 = vpop.f32.mrb[0].mxu0
        %v1742 = vadd.f32 0.0, %v1741
        %1743 = vmatprep.mubr.f32.mxu0 0.0
        %1744 = vmatmul.mubr.f32.gmra.mrb[0].mxu0 %v1671
        %v1745 = vpop.f32.mrb[0].mxu0
        %v1746 = vadd.f32 0.0, %v1745
        %v1747 = vpop.f32.mrb[0].mxu0
        %v1748 = vadd.f32 0.0, %v1747
        %1749 = vdwg.mxu0
        %v1750 = vmul.f32 %v1038, %v1653
        %v1751 = vmul.f32 %v1040, %v1655
        %v1752 = vmul.f32 %v1044, %v1659
        %v1753 = vmul.f32 %v1046, %v1661
        %v1754 = vmul.f32 %v1750, %v1740
        %v1755 = vmul.f32 %v1751, %v1742
        %v1756 = vmul.f32 %v1752, %v1746
        %v1757 = vmul.f32 %v1753, %v1748
        %v1758 = vadd.f32 %v1754, %v601
        %v1759 = vadd.f32 %v1755, %v602
        %v1760 = vadd.f32 %v1756, %v603
        %v1761 = vadd.f32 %v1757, %v604
        %v1762 = vmax.f32 %v1758, 0.0
        %v1763 = vmax.f32 %v1759, 0.0
        %v1764 = vmax.f32 %v1760, 0.0
        %v1765 = vmax.f32 %v1761, 0.0
        %1766 = vst [vmem:[%s595] sm:$0xff] %v1762
        %1767 = vst [vmem:[%s595 + $0x8] sm:$0xff] %v1763
        %1768 = vst [vmem:[%s595 + $0x10] sm:$0xff] %v1764
        %1769 = vst [vmem:[%s595 + $0x18] sm:$0xff] %v1765
        %s1770 = sand.u32 %s445, 1
        %s1771 = scalar_lea.sflag [#allocation3], %s1770
        %s1772 = sand.u32 %s445, 1
        %s1773 = smul.addr %s1772, 32
        %s1774 = scalar_lea.vmem [#allocation2], %s1773
        // Predicated region
        $region97: #{tpu_custom_call.1} parent=95 // pred_check
          %p1775 = pneg %p455
        $region98: #{tpu_custom_call.1} parent=95 // pred_check_branch
          %1777 = sbr.rel (%p1775) target = $region100
        $region99: #{tpu_custom_call.1} parent=95 // pred_region
          %s1779 = ssub.s32 512, 512
          %1780 = vsyncadd %s1771, %s1779
          %s1781 = smul.addr %s33, 4
          %s1782 = smul.addr %s1781, 128
          %s1783 = scalar_lea.hbm %s19, %s1782
          %s1784 = sshll.u32 %s1774, 4
          %s1785 = int_to_ptr.vmem [resolvable:$true] %s1784
          %1790 = dma.vmem_to_hbm [thread:$0]  %s1785, 512, %s1783, %s1771, 256, 256, 16
        $region100: #{tpu_custom_call.1} parent=95 // pred_fallthru
          _
      $region96: #{tpu_custom_call.1} parent=5 // pred_fallthru
        _
      %p1791 = scmp.le.s32.totalorder 2, %s28
      // Predicated region
      $region101: #{tpu_custom_call.1} parent=5 // pred_check
        %p1792 = pneg %p1791
      $region102: #{tpu_custom_call.1} parent=5 // pred_check_branch
        %1794 = sbr.rel (%p1792) target = $region104
      $region103: #{tpu_custom_call.1} parent=5 // pred_region
        %s1795 = ssub.s32 %s28, 2
        // Predicated region
        $region105: #{tpu_custom_call.1} parent=103 // pred_check
          %p1796 = pneg %p461
        $region106: #{tpu_custom_call.1} parent=103 // pred_check_branch
          %1798 = sbr.rel (%p1796) target = $region108
        $region107: #{tpu_custom_call.1} parent=103 // pred_region
          %s1799 = sand.u32 %s446, 1
          %s1800 = scalar_lea.sflag [#allocation3], %s1799
          %s1801 = sand.u32 %s446, 1
          %s1802 = smul.addr %s1801, 32
          %s1803 = scalar_lea.vmem [#allocation2], %s1802
          %1804 = dma.done %s1800, 512
        $region108: #{tpu_custom_call.1} parent=103 // pred_fallthru
          _
      $region104: #{tpu_custom_call.1} parent=5 // pred_fallthru
        _
    $region6: #{tpu_custom_call.1} parent=1 // loop_footer
      %s32 = sadd.s32 1, %s28
    $region7: #{tpu_custom_call.1} parent=1 // loop_footer_branch
      %27 = sbr.rel target = $region3
    $region8: #{tpu_custom_call.1} parent=1 // loop_exit
      _
    %1805 = vsyncpa [#allocation3], 1
    %s1806 = scalar_lea.sflag [#allocation3], 1
    %1807 = vsyncpa %s1806, 1

</llo_original>
